<compile_context>
chip_gen: v7x
topology: tpu7x:2x2x1
jax: 0.10.0
libtpu: 0.0.40
codegen_flags: <defaults>
</compile_context>

<pallas_src>
import functools

import jax
import jax.numpy as jnp
from jax import lax
from jax.experimental import pallas as pl
from jax.experimental.pallas import tpu as pltpu


def _encoder_kernel(x_ref, w1_ref, b1_ref, w21_ref, b21_ref, w22_ref, b22_ref,
                    mu_ref, logvar_ref):
    # x_ref: (bm, Din_p)  w1: (Din_p, H1_p)  w21/w22: (H1_p, L_p)  biases: (1, N)
    x = x_ref[...].astype(w1_ref.dtype)
    h1 = jnp.dot(x, w1_ref[...], preferred_element_type=jnp.float32)
    h1 = jnp.maximum(h1 + b1_ref[...], 0.0)                 # ReLU, f32
    h1 = h1.astype(w21_ref.dtype)
    mu = jnp.dot(h1, w21_ref[...], preferred_element_type=jnp.float32) + b21_ref[...]
    lv = jnp.dot(h1, w22_ref[...], preferred_element_type=jnp.float32) + b22_ref[...]
    mu_ref[...] = mu.astype(mu_ref.dtype)
    logvar_ref[...] = lv.astype(logvar_ref.dtype)


def _decoder_kernel(mu_ref, logvar_ref, eps_ref, w3_ref, b3_ref, w4_ref, b4_ref,
                    out_ref):
    # Fused reparameterize + decoder.
    mu = mu_ref[...]
    lv = logvar_ref[...]
    z = mu + eps_ref[...] * jnp.exp(0.5 * lv)               # reparameterize
    z = z.astype(w3_ref.dtype)
    h3 = jnp.dot(z, w3_ref[...], preferred_element_type=jnp.float32)
    h3 = jnp.maximum(h3 + b3_ref[...], 0.0).astype(w4_ref.dtype)
    out = jnp.dot(h3, w4_ref[...], preferred_element_type=jnp.float32) + b4_ref[...]
    out_ref[...] = jnp.tanh(out).astype(out_ref.dtype)


def _round_up(n, m):
    return ((n + m - 1) // m) * m


def _pad2d(a, rows, cols):
    return jnp.pad(a, ((0, rows - a.shape[0]), (0, cols - a.shape[1])))


@functools.partial(jax.jit, static_argnames=("block_m", "mxu_dtype"))
def vae_forward_pallas(x, w1, b1, w21, b21, w22, b22, w3, b3, w4, b4, eps,
                       *, block_m=256, mxu_dtype=jnp.float32):
    """VAE forward pass.

    x      : (b, c, d, h, w) float32
    weights: stored (in, out), i.e. transposed vs torch nn.Linear's (out, in)
    eps    : (b*d*h*w, latent_dim) standard-normal draws for reparameterize
    Returns (z, loss_kl, loss_vae) with z of shape (b, output_dim, d, h, w).
    """
    b, c, d, h, w = x.shape
    M = b * d * h * w
    din, hid1 = w1.shape
    lat = w21.shape[1]
    hid2 = w3.shape[1]
    dout = w4.shape[1]

    LANE = 128
    din_p = _round_up(din, LANE)
    hid1_p = _round_up(hid1, LANE)
    lat_p = _round_up(lat, LANE)
    hid2_p = _round_up(hid2, LANE)
    dout_p = _round_up(dout, LANE)
    bm = block_m
    M_p = _round_up(M, bm)

    f32 = jnp.float32
    # tokens: (b, d, h, w, c) -> (M, c), zero-padded to tile/lane multiples
    xm = jnp.transpose(x, (0, 2, 3, 4, 1)).reshape(M, din)
    xm_p = _pad2d(xm, M_p, din_p)
    eps_p = _pad2d(eps.astype(f32), M_p, lat_p)

    # Pad weights/biases with zeros (padded rows/cols contribute nothing),
    # cast MXU operands to mxu_dtype (f32 by default; bf16 for v6e/v7x peak).
    w1_p = _pad2d(w1, din_p, hid1_p).astype(mxu_dtype)
    w21_p = _pad2d(w21, hid1_p, lat_p).astype(mxu_dtype)
    w22_p = _pad2d(w22, hid1_p, lat_p).astype(mxu_dtype)
    w3_p = _pad2d(w3, lat_p, hid2_p).astype(mxu_dtype)
    w4_p = _pad2d(w4, hid2_p, dout_p).astype(mxu_dtype)
    b1_p = _pad2d(b1.reshape(1, -1).astype(f32), 1, hid1_p)
    b21_p = _pad2d(b21.reshape(1, -1).astype(f32), 1, lat_p)
    b22_p = _pad2d(b22.reshape(1, -1).astype(f32), 1, lat_p)
    b3_p = _pad2d(b3.reshape(1, -1).astype(f32), 1, hid2_p)
    b4_p = _pad2d(b4.reshape(1, -1).astype(f32), 1, dout_p)

    grid = (M_p // bm,)

    def _bytes(*arrs):
        return sum(int(a.size) * a.dtype.itemsize for a in arrs)

    # ---------------- encoder: fc1 + ReLU + fc21 / fc22 ----------------
    enc_cost = pl.CostEstimate(
        flops=2 * M_p * (din_p * hid1_p + 2 * hid1_p * lat_p),
        transcendentals=0,
        bytes_accessed=_bytes(xm_p, w1_p, b1_p, w21_p, b21_p, w22_p, b22_p)
        + 2 * M_p * lat_p * 4,
    )
    mu_p, logvar_p = pl.pallas_call(
        _encoder_kernel,
        out_shape=(jax.ShapeDtypeStruct((M_p, lat_p), f32),
                   jax.ShapeDtypeStruct((M_p, lat_p), f32)),
        grid_spec=pltpu.PrefetchScalarGridSpec(
            num_scalar_prefetch=0,
            grid=grid,
            in_specs=[
                pl.BlockSpec((bm, din_p), lambda i: (i, 0)),       # x tile
                pl.BlockSpec((din_p, hid1_p), lambda i: (0, 0)),   # W1 (resident)
                pl.BlockSpec((1, hid1_p), lambda i: (0, 0)),       # b1
                pl.BlockSpec((hid1_p, lat_p), lambda i: (0, 0)),   # W21
                pl.BlockSpec((1, lat_p), lambda i: (0, 0)),        # b21
                pl.BlockSpec((hid1_p, lat_p), lambda i: (0, 0)),   # W22
                pl.BlockSpec((1, lat_p), lambda i: (0, 0)),        # b22
            ],
            out_specs=[
                pl.BlockSpec((bm, lat_p), lambda i: (i, 0)),       # mu
                pl.BlockSpec((bm, lat_p), lambda i: (i, 0)),       # logvar
            ],
        ),
        compiler_params=pltpu.CompilerParams(
            dimension_semantics=("parallel",)),
        cost_estimate=enc_cost,
    )(xm_p, w1_p, b1_p, w21_p, b21_p, w22_p, b22_p)

    # -------- decoder: reparameterize + fc3 + ReLU + fc4 + tanh --------
    dec_cost = pl.CostEstimate(
        flops=2 * M_p * (lat_p * hid2_p + hid2_p * dout_p),
        transcendentals=M_p * (lat_p + dout_p),   # exp in reparam + final tanh
        bytes_accessed=_bytes(mu_p, logvar_p, eps_p, w3_p, b3_p, w4_p, b4_p)
        + M_p * dout_p * 4,
    )
    out_p = pl.pallas_call(
        _decoder_kernel,
        out_shape=jax.ShapeDtypeStruct((M_p, dout_p), f32),
        grid_spec=pltpu.PrefetchScalarGridSpec(
            num_scalar_prefetch=0,
            grid=grid,
            in_specs=[
                pl.BlockSpec((bm, lat_p), lambda i: (i, 0)),       # mu tile
                pl.BlockSpec((bm, lat_p), lambda i: (i, 0)),       # logvar tile
                pl.BlockSpec((bm, lat_p), lambda i: (i, 0)),       # eps tile
                pl.BlockSpec((lat_p, hid2_p), lambda i: (0, 0)),   # W3 (resident)
                pl.BlockSpec((1, hid2_p), lambda i: (0, 0)),       # b3
                pl.BlockSpec((hid2_p, dout_p), lambda i: (0, 0)),  # W4
                pl.BlockSpec((1, dout_p), lambda i: (0, 0)),       # b4
            ],
            out_specs=pl.BlockSpec((bm, dout_p), lambda i: (i, 0)),
        ),
        compiler_params=pltpu.CompilerParams(
            dimension_semantics=("parallel",)),
        cost_estimate=dec_cost,
    )(mu_p, logvar_p, eps_p, w3_p, b3_p, w4_p, b4_p)

    # Strip row/lane padding.
    mu = mu_p[:M, :lat]
    logvar = logvar_p[:M, :lat]
    out = out_p[:M, :dout]

    # TODO(synk): the KL / tnn losses are reduction-only and negligible FLOPs,
    # so they are computed in plain jnp here; eps is drawn with jax.random in
    # the caller (torch.randn_like has no deterministic in-kernel equivalent
    # that would match a reference).
    mu5 = mu.reshape(b, d, h, w, lat)
    lv5 = logvar.reshape(b, d, h, w, lat)
    loss_kl = jnp.mean(
        -0.5 * jnp.sum(1.0 + lv5 - mu5 * mu5 - jnp.exp(lv5), axis=4))

    s = mu5 + lv5
    # trace(sqrt(X^T X)) per sample == sum over frames of the frame's Frobenius norm
    frame_norm = jnp.sqrt(jnp.sum(s * s, axis=(2, 3, 4)))   # (b, d)
    tnn_val = jnp.sum(frame_norm, axis=1) + 1e-8            # (b,)
    loss_vae = jnp.sum(jnp.log(tnn_val + 1.0)) / b

    z5 = jnp.transpose(out.reshape(b, d, h, w, dout), (0, 4, 1, 2, 3))
    return z5, loss_kl, loss_vae


def vae_reference(x, w1, b1, w21, b21, w22, b22, w3, b3, w4, b4, eps):
    """Pure-JAX reference matching the PyTorch module (same eps)."""
    bsz, c, d, h, w = x.shape
    hp = lax.Precision.HIGHEST
    xm = jnp.transpose(x, (0, 2, 3, 4, 1)).reshape(-1, c)
    h1 = jnp.maximum(jnp.dot(xm, w1, precision=hp) + b1, 0.0)
    mu = jnp.dot(h1, w21, precision=hp) + b21
    lv = jnp.dot(h1, w22, precision=hp) + b22
    z = mu + eps * jnp.exp(0.5 * lv)
    h3 = jnp.maximum(jnp.dot(z, w3, precision=hp) + b3, 0.0)
    out = jnp.tanh(jnp.dot(h3, w4, precision=hp) + b4)

    lat = w21.shape[1]
    dout = w4.shape[1]
    mu5 = mu.reshape(bsz, d, h, w, lat)
    lv5 = lv.reshape(bsz, d, h, w, lat)
    loss_kl = jnp.mean(
        -0.5 * jnp.sum(1.0 + lv5 - mu5 ** 2 - jnp.exp(lv5), axis=4))
    s = mu5 + lv5
    tnn_val = jnp.sum(jnp.sqrt(jnp.sum(s * s, axis=(2, 3, 4))), axis=1) + 1e-8
    loss_vae = jnp.sum(jnp.log(tnn_val + 1.0)) / bsz
    z5 = jnp.transpose(out.reshape(bsz, d, h, w, dout), (0, 4, 1, 2, 3))
    return z5, loss_kl, loss_vae


if __name__ == "__main__":
    # Small shapes consistent with the module: x is (b, c, d, h, w);
    # input_dim = c, fc1 hidden = 24*8 = 192, fc3 hidden = 128.
    b, c, d, h, w = 2, 4, 4, 8, 8            # M = b*d*h*w = 512 tokens
    input_dim, latent_dim, output_dim = c, 16, 4
    hidden1, hidden2 = 24 * 8, 128

    key = jax.random.PRNGKey(0)
    ks = jax.random.split(key, 12)
    x = jax.random.normal(ks[0], (b, c, d, h, w), jnp.float32)
    # Parameters stored as (in, out) — transpose of torch nn.Linear's (out, in).
    w1 = jax.random.normal(ks[1], (input_dim, hidden1), jnp.float32) * 0.1
    b1 = jax.random.normal(ks[2], (hidden1,), jnp.float32) * 0.1
    w21 = jax.random.normal(ks[3], (hidden1, latent_dim), jnp.float32) * 0.1
    b21 = jax.random.normal(ks[4], (latent_dim,), jnp.float32) * 0.1
    w22 = jax.random.normal(ks[5], (hidden1, latent_dim), jnp.float32) * 0.1
    b22 = jax.random.normal(ks[6], (latent_dim,), jnp.float32) * 0.1
    w3 = jax.random.normal(ks[7], (latent_dim, hidden2), jnp.float32) * 0.1
    b3 = jax.random.normal(ks[8], (hidden2,), jnp.float32) * 0.1
    w4 = jax.random.normal(ks[9], (hidden2, output_dim), jnp.float32) * 0.1
    b4 = jax.random.normal(ks[10], (output_dim,), jnp.float32) * 0.1
    eps = jax.random.normal(ks[11], (b * d * h * w, latent_dim), jnp.float32)

    z5, loss_kl, loss_vae = vae_forward_pallas(
        x, w1, b1, w21, b21, w22, b22, w3, b3, w4, b4, eps, block_m=256)
    z5 = jax.block_until_ready(z5)

    z5_ref, kl_ref, vae_ref = vae_reference(
        x, w1, b1, w21, b21, w22, b22, w3, b3, w4, b4, eps)

    assert z5.shape == (b, output_dim, d, h, w)
    assert jnp.allclose(z5, z5_ref, atol=1e-4, rtol=1e-4), "z mismatch"
    assert jnp.allclose(loss_kl, kl_ref, atol=1e-4, rtol=1e-4), "loss_kl mismatch"
    assert jnp.allclose(loss_vae, vae_ref, atol=1e-4, rtol=1e-4), "loss_vae mismatch"

    print("KERNEL_OK")
</pallas_src>

<mosaic_0001>
module attributes {stable_mosaic.version = 11 : i64} {
  func.func @_encoder_kernel(%arg0: i32, %arg1: memref<256x128xf32, #tpu.memory_space<vmem>>, %arg2: memref<128x256xf32, #tpu.memory_space<vmem>>, %arg3: memref<1x256xf32, #tpu.memory_space<vmem>>, %arg4: memref<256x128xf32, #tpu.memory_space<vmem>>, %arg5: memref<1x128xf32, #tpu.memory_space<vmem>>, %arg6: memref<256x128xf32, #tpu.memory_space<vmem>>, %arg7: memref<1x128xf32, #tpu.memory_space<vmem>>, %arg8: memref<256x128xf32, #tpu.memory_space<vmem>>, %arg9: memref<256x128xf32, #tpu.memory_space<vmem>>) attributes {dimension_semantics = [#tpu.dimension_semantics<parallel>], iteration_bounds = array<i64: 2>, scalar_prefetch = 0 : i64, scratch_operands = 0 : i64, tpu.core_type = #tpu.core_type<tc>, window_params = [{transform_indices = @transform_0, window_bounds = array<i64: 256, 128>}, {pipeline_mode = #tpu.pipeline_mode<synchronous>, transform_indices = @transform_1, window_bounds = array<i64: 128, 256>}, {pipeline_mode = #tpu.pipeline_mode<synchronous>, transform_indices = @transform_2, window_bounds = array<i64: 1, 256>}, {pipeline_mode = #tpu.pipeline_mode<synchronous>, transform_indices = @transform_3, window_bounds = array<i64: 256, 128>}, {pipeline_mode = #tpu.pipeline_mode<synchronous>, transform_indices = @transform_4, window_bounds = array<i64: 1, 128>}, {pipeline_mode = #tpu.pipeline_mode<synchronous>, transform_indices = @transform_5, window_bounds = array<i64: 256, 128>}, {pipeline_mode = #tpu.pipeline_mode<synchronous>, transform_indices = @transform_6, window_bounds = array<i64: 1, 128>}, {transform_indices = @transform_7, window_bounds = array<i64: 256, 128>}, {transform_indices = @transform_8, window_bounds = array<i64: 256, 128>}]} {
    %c0 = arith.constant 0 : index
    %c0_0 = arith.constant 0 : index
    %0 = vector.load %arg1[%c0, %c0_0] : memref<256x128xf32, #tpu.memory_space<vmem>>, vector<256x128xf32>
    %c0_1 = arith.constant 0 : index
    %c0_2 = arith.constant 0 : index
    %1 = vector.load %arg2[%c0_1, %c0_2] : memref<128x256xf32, #tpu.memory_space<vmem>>, vector<128x256xf32>
    %cst = arith.constant dense<0.000000e+00> : vector<256x256xf32>
    %2 = tpu.matmul %0, %1, %cst {dimension_numbers = #tpu.dot_dimension_numbers<[1], [0], [0], [1], [0, 0, 1, 1], [], []>} : vector<256x128xf32>, vector<128x256xf32>, vector<256x256xf32> -> vector<256x256xf32>
    %c0_3 = arith.constant 0 : index
    %c0_4 = arith.constant 0 : index
    %3 = vector.load %arg3[%c0_3, %c0_4] : memref<1x256xf32, #tpu.memory_space<vmem>>, vector<1x256xf32>
    %4 = vector.broadcast %3 : vector<1x256xf32> to vector<256x256xf32>
    %5 = arith.addf %2, %4 : vector<256x256xf32>
    %cst_5 = arith.constant 0.000000e+00 : f32
    %6 = vector.broadcast %cst_5 : f32 to vector<256x256xf32>
    %7 = arith.maximumf %5, %6 : vector<256x256xf32>
    %c0_6 = arith.constant 0 : index
    %c0_7 = arith.constant 0 : index
    %8 = vector.load %arg4[%c0_6, %c0_7] : memref<256x128xf32, #tpu.memory_space<vmem>>, vector<256x128xf32>
    %cst_8 = arith.constant dense<0.000000e+00> : vector<256x128xf32>
    %9 = tpu.matmul %7, %8, %cst_8 {dimension_numbers = #tpu.dot_dimension_numbers<[1], [0], [0], [1], [0, 0, 1, 1], [], []>} : vector<256x256xf32>, vector<256x128xf32>, vector<256x128xf32> -> vector<256x128xf32>
    %c0_9 = arith.constant 0 : index
    %c0_10 = arith.constant 0 : index
    %10 = vector.load %arg5[%c0_9, %c0_10] : memref<1x128xf32, #tpu.memory_space<vmem>>, vector<1x128xf32>
    %11 = vector.broadcast %10 : vector<1x128xf32> to vector<256x128xf32>
    %12 = arith.addf %9, %11 : vector<256x128xf32>
    %c0_11 = arith.constant 0 : index
    %c0_12 = arith.constant 0 : index
    %13 = vector.load %arg6[%c0_11, %c0_12] : memref<256x128xf32, #tpu.memory_space<vmem>>, vector<256x128xf32>
    %cst_13 = arith.constant dense<0.000000e+00> : vector<256x128xf32>
    %14 = tpu.matmul %7, %13, %cst_13 {dimension_numbers = #tpu.dot_dimension_numbers<[1], [0], [0], [1], [0, 0, 1, 1], [], []>} : vector<256x256xf32>, vector<256x128xf32>, vector<256x128xf32> -> vector<256x128xf32>
    %c0_14 = arith.constant 0 : index
    %c0_15 = arith.constant 0 : index
    %15 = vector.load %arg7[%c0_14, %c0_15] : memref<1x128xf32, #tpu.memory_space<vmem>>, vector<1x128xf32>
    %16 = vector.broadcast %15 : vector<1x128xf32> to vector<256x128xf32>
    %17 = arith.addf %14, %16 : vector<256x128xf32>
    %c0_16 = arith.constant 0 : index
    %c0_17 = arith.constant 0 : index
    %18 = vector.load %arg8[%c0_16, %c0_17] : memref<256x128xf32, #tpu.memory_space<vmem>>, vector<256x128xf32>
    tpu.vector_store %arg8[%c0_16, %c0_17], %12 {strides = array<i32>} : memref<256x128xf32, #tpu.memory_space<vmem>>, vector<256x128xf32>,
    %c0_18 = arith.constant 0 : index
    %c0_19 = arith.constant 0 : index
    %19 = vector.load %arg9[%c0_18, %c0_19] : memref<256x128xf32, #tpu.memory_space<vmem>>, vector<256x128xf32>
    tpu.vector_store %arg9[%c0_18, %c0_19], %17 {strides = array<i32>} : memref<256x128xf32, #tpu.memory_space<vmem>>, vector<256x128xf32>,
    return
  }
  func.func @transform_0(%arg0: i32) -> (i32, i32) {
    %c0_i32 = arith.constant 0 : i32
    %c0_i32_0 = arith.constant 0 : i32
    return %arg0, %c0_i32 : i32, i32
  }
  func.func @transform_1(%arg0: i32) -> (i32, i32) {
    %c0_i32 = arith.constant 0 : i32
    %c0_i32_0 = arith.constant 0 : i32
    %c0_i32_1 = arith.constant 0 : i32
    return %c0_i32, %c0_i32_0 : i32, i32
  }
  func.func @transform_2(%arg0: i32) -> (i32, i32) {
    %c0_i32 = arith.constant 0 : i32
    %c0_i32_0 = arith.constant 0 : i32
    %c0_i32_1 = arith.constant 0 : i32
    return %c0_i32, %c0_i32_0 : i32, i32
  }
  func.func @transform_3(%arg0: i32) -> (i32, i32) {
    %c0_i32 = arith.constant 0 : i32
    %c0_i32_0 = arith.constant 0 : i32
    %c0_i32_1 = arith.constant 0 : i32
    return %c0_i32, %c0_i32_0 : i32, i32
  }
  func.func @transform_4(%arg0: i32) -> (i32, i32) {
    %c0_i32 = arith.constant 0 : i32
    %c0_i32_0 = arith.constant 0 : i32
    %c0_i32_1 = arith.constant 0 : i32
    return %c0_i32, %c0_i32_0 : i32, i32
  }
  func.func @transform_5(%arg0: i32) -> (i32, i32) {
    %c0_i32 = arith.constant 0 : i32
    %c0_i32_0 = arith.constant 0 : i32
    %c0_i32_1 = arith.constant 0 : i32
    return %c0_i32, %c0_i32_0 : i32, i32
  }
  func.func @transform_6(%arg0: i32) -> (i32, i32) {
    %c0_i32 = arith.constant 0 : i32
    %c0_i32_0 = arith.constant 0 : i32
    %c0_i32_1 = arith.constant 0 : i32
    return %c0_i32, %c0_i32_0 : i32, i32
  }
  func.func @transform_7(%arg0: i32) -> (i32, i32) {
    %c0_i32 = arith.constant 0 : i32
    %c0_i32_0 = arith.constant 0 : i32
    return %arg0, %c0_i32 : i32, i32
  }
  func.func @transform_8(%arg0: i32) -> (i32, i32) {
    %c0_i32 = arith.constant 0 : i32
    %c0_i32_0 = arith.constant 0 : i32
    return %arg0, %c0_i32 : i32, i32
  }
}

module attributes {stable_mosaic.version = 11 : i64} {
  func.func @_decoder_kernel(%arg0: i32, %arg1: memref<256x128xf32, #tpu.memory_space<vmem>>, %arg2: memref<256x128xf32, #tpu.memory_space<vmem>>, %arg3: memref<256x128xf32, #tpu.memory_space<vmem>>, %arg4: memref<128x128xf32, #tpu.memory_space<vmem>>, %arg5: memref<1x128xf32, #tpu.memory_space<vmem>>, %arg6: memref<128x128xf32, #tpu.memory_space<vmem>>, %arg7: memref<1x128xf32, #tpu.memory_space<vmem>>, %arg8: memref<256x128xf32, #tpu.memory_space<vmem>>) attributes {dimension_semantics = [#tpu.dimension_semantics<parallel>], iteration_bounds = array<i64: 2>, scalar_prefetch = 0 : i64, scratch_operands = 0 : i64, tpu.core_type = #tpu.core_type<tc>, window_params = [{transform_indices = @transform_0, window_bounds = array<i64: 256, 128>}, {transform_indices = @transform_1, window_bounds = array<i64: 256, 128>}, {transform_indices = @transform_2, window_bounds = array<i64: 256, 128>}, {pipeline_mode = #tpu.pipeline_mode<synchronous>, transform_indices = @transform_3, window_bounds = array<i64: 128, 128>}, {pipeline_mode = #tpu.pipeline_mode<synchronous>, transform_indices = @transform_4, window_bounds = array<i64: 1, 128>}, {pipeline_mode = #tpu.pipeline_mode<synchronous>, transform_indices = @transform_5, window_bounds = array<i64: 128, 128>}, {pipeline_mode = #tpu.pipeline_mode<synchronous>, transform_indices = @transform_6, window_bounds = array<i64: 1, 128>}, {transform_indices = @transform_7, window_bounds = array<i64: 256, 128>}]} {
    %c0 = arith.constant 0 : index
    %c0_0 = arith.constant 0 : index
    %0 = vector.load %arg1[%c0, %c0_0] : memref<256x128xf32, #tpu.memory_space<vmem>>, vector<256x128xf32>
    %c0_1 = arith.constant 0 : index
    %c0_2 = arith.constant 0 : index
    %1 = vector.load %arg2[%c0_1, %c0_2] : memref<256x128xf32, #tpu.memory_space<vmem>>, vector<256x128xf32>
    %c0_3 = arith.constant 0 : index
    %c0_4 = arith.constant 0 : index
    %2 = vector.load %arg3[%c0_3, %c0_4] : memref<256x128xf32, #tpu.memory_space<vmem>>, vector<256x128xf32>
    %cst = arith.constant 5.000000e-01 : f32
    %3 = vector.broadcast %cst : f32 to vector<256x128xf32>
    %4 = arith.mulf %3, %1 : vector<256x128xf32>
    %5 = math.exp %4 : vector<256x128xf32>
    %6 = arith.mulf %2, %5 : vector<256x128xf32>
    %7 = arith.addf %0, %6 : vector<256x128xf32>
    %c0_5 = arith.constant 0 : index
    %c0_6 = arith.constant 0 : index
    %8 = vector.load %arg4[%c0_5, %c0_6] : memref<128x128xf32, #tpu.memory_space<vmem>>, vector<128x128xf32>
    %cst_7 = arith.constant dense<0.000000e+00> : vector<256x128xf32>
    %9 = tpu.matmul %7, %8, %cst_7 {dimension_numbers = #tpu.dot_dimension_numbers<[1], [0], [0], [1], [0, 0, 1, 1], [], []>} : vector<256x128xf32>, vector<128x128xf32>, vector<256x128xf32> -> vector<256x128xf32>
    %c0_8 = arith.constant 0 : index
    %c0_9 = arith.constant 0 : index
    %10 = vector.load %arg5[%c0_8, %c0_9] : memref<1x128xf32, #tpu.memory_space<vmem>>, vector<1x128xf32>
    %11 = vector.broadcast %10 : vector<1x128xf32> to vector<256x128xf32>
    %12 = arith.addf %9, %11 : vector<256x128xf32>
    %cst_10 = arith.constant 0.000000e+00 : f32
    %13 = vector.broadcast %cst_10 : f32 to vector<256x128xf32>
    %14 = arith.maximumf %12, %13 : vector<256x128xf32>
    %c0_11 = arith.constant 0 : index
    %c0_12 = arith.constant 0 : index
    %15 = vector.load %arg6[%c0_11, %c0_12] : memref<128x128xf32, #tpu.memory_space<vmem>>, vector<128x128xf32>
    %cst_13 = arith.constant dense<0.000000e+00> : vector<256x128xf32>
    %16 = tpu.matmul %14, %15, %cst_13 {dimension_numbers = #tpu.dot_dimension_numbers<[1], [0], [0], [1], [0, 0, 1, 1], [], []>} : vector<256x128xf32>, vector<128x128xf32>, vector<256x128xf32> -> vector<256x128xf32>
    %c0_14 = arith.constant 0 : index
    %c0_15 = arith.constant 0 : index
    %17 = vector.load %arg7[%c0_14, %c0_15] : memref<1x128xf32, #tpu.memory_space<vmem>>, vector<1x128xf32>
    %18 = vector.broadcast %17 : vector<1x128xf32> to vector<256x128xf32>
    %19 = arith.addf %16, %18 : vector<256x128xf32>
    %20 = math.tanh %19 : vector<256x128xf32>
    %c0_16 = arith.constant 0 : index
    %c0_17 = arith.constant 0 : index
    %21 = vector.load %arg8[%c0_16, %c0_17] : memref<256x128xf32, #tpu.memory_space<vmem>>, vector<256x128xf32>
    tpu.vector_store %arg8[%c0_16, %c0_17], %20 {strides = array<i32>} : memref<256x128xf32, #tpu.memory_space<vmem>>, vector<256x128xf32>,
    return
  }
  func.func @transform_0(%arg0: i32) -> (i32, i32) {
    %c0_i32 = arith.constant 0 : i32
    %c0_i32_0 = arith.constant 0 : i32
    return %arg0, %c0_i32 : i32, i32
  }
  func.func @transform_1(%arg0: i32) -> (i32, i32) {
    %c0_i32 = arith.constant 0 : i32
    %c0_i32_0 = arith.constant 0 : i32
    return %arg0, %c0_i32 : i32, i32
  }
  func.func @transform_2(%arg0: i32) -> (i32, i32) {
    %c0_i32 = arith.constant 0 : i32
    %c0_i32_0 = arith.constant 0 : i32
    return %arg0, %c0_i32 : i32, i32
  }
  func.func @transform_3(%arg0: i32) -> (i32, i32) {
    %c0_i32 = arith.constant 0 : i32
    %c0_i32_0 = arith.constant 0 : i32
    %c0_i32_1 = arith.constant 0 : i32
    return %c0_i32, %c0_i32_0 : i32, i32
  }
  func.func @transform_4(%arg0: i32) -> (i32, i32) {
    %c0_i32 = arith.constant 0 : i32
    %c0_i32_0 = arith.constant 0 : i32
    %c0_i32_1 = arith.constant 0 : i32
    return %c0_i32, %c0_i32_0 : i32, i32
  }
  func.func @transform_5(%arg0: i32) -> (i32, i32) {
    %c0_i32 = arith.constant 0 : i32
    %c0_i32_0 = arith.constant 0 : i32
    %c0_i32_1 = arith.constant 0 : i32
    return %c0_i32, %c0_i32_0 : i32, i32
  }
  func.func @transform_6(%arg0: i32) -> (i32, i32) {
    %c0_i32 = arith.constant 0 : i32
    %c0_i32_0 = arith.constant 0 : i32
    %c0_i32_1 = arith.constant 0 : i32
    return %c0_i32, %c0_i32_0 : i32, i32
  }
  func.func @transform_7(%arg0: i32) -> (i32, i32) {
    %c0_i32 = arith.constant 0 : i32
    %c0_i32_0 = arith.constant 0 : i32
    return %arg0, %c0_i32 : i32, i32
  }
}

</mosaic_0001>

<llo_original>
// kernel: vae_forward_pallas.2
$region0: #{vae_forward_pallas.2}
  #allocation0 [shape = 'u32[]', space=smem, size = 0x4, offset = 0x4, fixed_abs, tag = 'smem constant byte address 0x4 - core index']
  #allocation1 [shape = 'u32[144,128]{1,0:T(1,128)}', space=vmem, size = 0x12000, scoped, tag = 'internal scratch']
  %s0 = inlined_call_operand.vmem [shape: f32[512,128], index: 0, kind: input, shape index: {}]
  %s1 = inlined_call_operand.vmem [shape: f32[128,256], index: 1, kind: input, shape index: {}]
  %s2 = inlined_call_operand.vmem [shape: f32[1,256], index: 2, kind: input, shape index: {}]
  %s3 = inlined_call_operand.vmem [shape: f32[256,128], index: 3, kind: input, shape index: {}]
  %s4 = inlined_call_operand.vmem [shape: f32[1,128], index: 4, kind: input, shape index: {}]
  %s5 = inlined_call_operand.vmem [shape: f32[256,128], index: 5, kind: input, shape index: {}]
  %s6 = inlined_call_operand.vmem [shape: f32[1,128], index: 6, kind: input, shape index: {}]
  %s7 = inlined_call_operand.vmem [shape: f32[512,128], index: 7, kind: output, shape index: {0}]
  %s8 = inlined_call_operand.vmem [shape: f32[512,128], index: 8, kind: output, shape index: {1}]
  %9 = xla_tuple %s7, %s8
  %s10 = sld [smem:[#allocation0]]
  $region69: #{vae_forward_pallas.2} parent=0
    _
  %s12 = ssub.s32 1, %s10
  %s13 = scalar_select 0, %s12, %s10
  loop: start=0, step=1, limit=4
  $region2: #{vae_forward_pallas.2} parent=0 // loop_pre_header
    _
  $region3: #{vae_forward_pallas.2} parent=0 // loop_header
    %s15 = sphi 0, %s19
    %p16 = scmp.ge.s32.totalorder %s15, 4
    %s25 = sphi 0, %s27
    %s28 = sphi 0, %s25
    %s29 = sphi 0, %s28
    %s45 = sphi 0, %s29
    %s49 = sphi 0, %s49
    %s51 = sphi 0, %s49
    %s52 = sphi 0, %s51
    %s66 = sphi 0, %s52
    %s70 = sphi 0, %s70
    %s72 = sphi 0, %s70
    %s73 = sphi 0, %s72
    %s87 = sphi 0, %s73
    %s91 = sphi 0, %s91
    %s93 = sphi 0, %s91
    %s94 = sphi 0, %s93
    %s108 = sphi 0, %s94
    %s112 = sphi 0, %s112
    %s114 = sphi 0, %s112
    %s115 = sphi 0, %s114
    %s129 = sphi 0, %s115
    %s133 = sphi 0, %s133
    %s135 = sphi 0, %s133
    %s136 = sphi 0, %s135
    %s150 = sphi 0, %s136
    %s154 = sphi 0, %s154
    %s156 = sphi 0, %s154
    %s157 = sphi 0, %s156
    %s171 = sphi 0, %s157
    %s177 = sphi 0, %s179
    %s180 = sphi 0, %s177
    %s181 = sphi 0, %s180
    %s197 = sphi 0, %s181
    %s203 = sphi 0, %s205
    %s206 = sphi 0, %s203
    %s207 = sphi 0, %s206
    %s223 = sphi 0, %s207
  $region4: #{vae_forward_pallas.2} parent=0 // loop_header_branch
    %18 = sbr.rel (%p16) target = $region8
  $region5: #{vae_forward_pallas.2} parent=0 // loop_body
    %s20 = ssub.s32 %s15, 1
    %s21 = ssub.s32 %s15, 2
    %s22 = sadd.s32 %s15, 1
    %s23 = ssub.s32 %s15, %s22
    %p24 = scmp.eq.s32.totalorder %s23, 0
    %s26 = sadd.s32 %s25, 1
    %s27 = scalar_select %p24, %s25, %s26
    %p30 = pneg %p24
    %p31 = scmp.eq.s32.totalorder %s15, 1
    %p32 = por %p30, %p31
    %p33 = scmp.ne.s32.totalorder %s25, %s28
    %p34 = scmp.eq.s32.totalorder %s15, 0
    %p35 = por %p33, %p34
    %p36 = scmp.ne.s32.totalorder %s25, %s28
    %p37 = scmp.eq.s32.totalorder %s20, 1
    %p38 = por %p36, %p37
    %p39 = scmp.ne.s32.totalorder %s28, %s29
    %p40 = scmp.eq.s32.totalorder %s20, 0
    %p41 = por %p39, %p40
    %p42 = scmp.ne.s32.totalorder %s28, %s29
    %p43 = scmp.eq.s32.totalorder %s21, 1
    %p44 = por %p42, %p43
    %p46 = scmp.ne.s32.totalorder %s29, %s45
    %p47 = scmp.eq.s32.totalorder %s21, 0
    %p48 = por %p46, %p47
    %s50 = sadd.s32 %s49, 1
    %p53 = scmp.eq.s32.totalorder %s15, 1
    %p54 = scmp.ne.s32.totalorder %s49, %s51
    %p55 = scmp.eq.s32.totalorder %s15, 0
    %p56 = por %p54, %p55
    %p57 = scmp.ne.s32.totalorder %s49, %s51
    %p58 = scmp.eq.s32.totalorder %s20, 1
    %p59 = por %p57, %p58
    %p60 = scmp.ne.s32.totalorder %s51, %s52
    %p61 = scmp.eq.s32.totalorder %s20, 0
    %p62 = por %p60, %p61
    %p63 = scmp.ne.s32.totalorder %s51, %s52
    %p64 = scmp.eq.s32.totalorder %s21, 1
    %p65 = por %p63, %p64
    %p67 = scmp.ne.s32.totalorder %s52, %s66
    %p68 = scmp.eq.s32.totalorder %s21, 0
    %p69 = por %p67, %p68
    %s71 = sadd.s32 %s70, 1
    %p74 = scmp.eq.s32.totalorder %s15, 1
    %p75 = scmp.ne.s32.totalorder %s70, %s72
    %p76 = scmp.eq.s32.totalorder %s15, 0
    %p77 = por %p75, %p76
    %p78 = scmp.ne.s32.totalorder %s70, %s72
    %p79 = scmp.eq.s32.totalorder %s20, 1
    %p80 = por %p78, %p79
    %p81 = scmp.ne.s32.totalorder %s72, %s73
    %p82 = scmp.eq.s32.totalorder %s20, 0
    %p83 = por %p81, %p82
    %p84 = scmp.ne.s32.totalorder %s72, %s73
    %p85 = scmp.eq.s32.totalorder %s21, 1
    %p86 = por %p84, %p85
    %p88 = scmp.ne.s32.totalorder %s73, %s87
    %p89 = scmp.eq.s32.totalorder %s21, 0
    %p90 = por %p88, %p89
    %s92 = sadd.s32 %s91, 1
    %p95 = scmp.eq.s32.totalorder %s15, 1
    %p96 = scmp.ne.s32.totalorder %s91, %s93
    %p97 = scmp.eq.s32.totalorder %s15, 0
    %p98 = por %p96, %p97
    %p99 = scmp.ne.s32.totalorder %s91, %s93
    %p100 = scmp.eq.s32.totalorder %s20, 1
    %p101 = por %p99, %p100
    %p102 = scmp.ne.s32.totalorder %s93, %s94
    %p103 = scmp.eq.s32.totalorder %s20, 0
    %p104 = por %p102, %p103
    %p105 = scmp.ne.s32.totalorder %s93, %s94
    %p106 = scmp.eq.s32.totalorder %s21, 1
    %p107 = por %p105, %p106
    %p109 = scmp.ne.s32.totalorder %s94, %s108
    %p110 = scmp.eq.s32.totalorder %s21, 0
    %p111 = por %p109, %p110
    %s113 = sadd.s32 %s112, 1
    %p116 = scmp.eq.s32.totalorder %s15, 1
    %p117 = scmp.ne.s32.totalorder %s112, %s114
    %p118 = scmp.eq.s32.totalorder %s15, 0
    %p119 = por %p117, %p118
    %p120 = scmp.ne.s32.totalorder %s112, %s114
    %p121 = scmp.eq.s32.totalorder %s20, 1
    %p122 = por %p120, %p121
    %p123 = scmp.ne.s32.totalorder %s114, %s115
    %p124 = scmp.eq.s32.totalorder %s20, 0
    %p125 = por %p123, %p124
    %p126 = scmp.ne.s32.totalorder %s114, %s115
    %p127 = scmp.eq.s32.totalorder %s21, 1
    %p128 = por %p126, %p127
    %p130 = scmp.ne.s32.totalorder %s115, %s129
    %p131 = scmp.eq.s32.totalorder %s21, 0
    %p132 = por %p130, %p131
    %s134 = sadd.s32 %s133, 1
    %p137 = scmp.eq.s32.totalorder %s15, 1
    %p138 = scmp.ne.s32.totalorder %s133, %s135
    %p139 = scmp.eq.s32.totalorder %s15, 0
    %p140 = por %p138, %p139
    %p141 = scmp.ne.s32.totalorder %s133, %s135
    %p142 = scmp.eq.s32.totalorder %s20, 1
    %p143 = por %p141, %p142
    %p144 = scmp.ne.s32.totalorder %s135, %s136
    %p145 = scmp.eq.s32.totalorder %s20, 0
    %p146 = por %p144, %p145
    %p147 = scmp.ne.s32.totalorder %s135, %s136
    %p148 = scmp.eq.s32.totalorder %s21, 1
    %p149 = por %p147, %p148
    %p151 = scmp.ne.s32.totalorder %s136, %s150
    %p152 = scmp.eq.s32.totalorder %s21, 0
    %p153 = por %p151, %p152
    %s155 = sadd.s32 %s154, 1
    %p158 = scmp.eq.s32.totalorder %s15, 1
    %p159 = scmp.ne.s32.totalorder %s154, %s156
    %p160 = scmp.eq.s32.totalorder %s15, 0
    %p161 = por %p159, %p160
    %p162 = scmp.ne.s32.totalorder %s154, %s156
    %p163 = scmp.eq.s32.totalorder %s20, 1
    %p164 = por %p162, %p163
    %p165 = scmp.ne.s32.totalorder %s156, %s157
    %p166 = scmp.eq.s32.totalorder %s20, 0
    %p167 = por %p165, %p166
    %p168 = scmp.ne.s32.totalorder %s156, %s157
    %p169 = scmp.eq.s32.totalorder %s21, 1
    %p170 = por %p168, %p169
    %p172 = scmp.ne.s32.totalorder %s157, %s171
    %p173 = scmp.eq.s32.totalorder %s21, 0
    %p174 = por %p172, %p173
    %s175 = ssub.s32 %s15, %s22
    %p176 = scmp.eq.s32.totalorder %s175, 0
    %s178 = sadd.s32 %s177, 1
    %s179 = scalar_select %p176, %s177, %s178
    %p182 = pneg %p176
    %p183 = scmp.eq.s32.totalorder %s15, 1
    %p184 = por %p182, %p183
    %p185 = scmp.ne.s32.totalorder %s177, %s180
    %p186 = scmp.eq.s32.totalorder %s15, 0
    %p187 = por %p185, %p186
    %p188 = scmp.ne.s32.totalorder %s177, %s180
    %p189 = scmp.eq.s32.totalorder %s20, 1
    %p190 = por %p188, %p189
    %p191 = scmp.ne.s32.totalorder %s180, %s181
    %p192 = scmp.eq.s32.totalorder %s20, 0
    %p193 = por %p191, %p192
    %p194 = scmp.ne.s32.totalorder %s180, %s181
    %p195 = scmp.eq.s32.totalorder %s21, 1
    %p196 = por %p194, %p195
    %p198 = scmp.ne.s32.totalorder %s181, %s197
    %p199 = scmp.eq.s32.totalorder %s21, 0
    %p200 = por %p198, %p199
    %s201 = ssub.s32 %s15, %s22
    %p202 = scmp.eq.s32.totalorder %s201, 0
    %s204 = sadd.s32 %s203, 1
    %s205 = scalar_select %p202, %s203, %s204
    %p208 = pneg %p202
    %p209 = scmp.eq.s32.totalorder %s15, 1
    %p210 = por %p208, %p209
    %p211 = scmp.ne.s32.totalorder %s203, %s206
    %p212 = scmp.eq.s32.totalorder %s15, 0
    %p213 = por %p211, %p212
    %p214 = scmp.ne.s32.totalorder %s203, %s206
    %p215 = scmp.eq.s32.totalorder %s20, 1
    %p216 = por %p214, %p215
    %p217 = scmp.ne.s32.totalorder %s206, %s207
    %p218 = scmp.eq.s32.totalorder %s20, 0
    %p219 = por %p217, %p218
    %p220 = scmp.ne.s32.totalorder %s206, %s207
    %p221 = scmp.eq.s32.totalorder %s21, 1
    %p222 = por %p220, %p221
    %p224 = scmp.ne.s32.totalorder %s207, %s223
    %p225 = scmp.eq.s32.totalorder %s21, 0
    %p226 = por %p224, %p225
    %p227 = scmp.le.s32.totalorder 1, %s15
    %p228 = scmp.lt.s32.totalorder %s15, 3
    %p229 = pnand %p227, %p228
    %p230 = pneg %p229
    // Predicated region
    $region9: #{vae_forward_pallas.2} parent=5 // pred_check
      _
    $region10: #{vae_forward_pallas.2} parent=5 // pred_check_branch
      %232 = sbr.rel (%p229) target = $region12
    $region11: #{vae_forward_pallas.2} parent=5 // pred_region
      %s233 = ssub.s32 %s15, 1
      // Predicated region
      $region13: #{vae_forward_pallas.2} parent=11 // pred_check
        %p234 = pneg %p62
      $region14: #{vae_forward_pallas.2} parent=11 // pred_check_branch
        %236 = sbr.rel (%p234) target = $region16
      $region15: #{vae_forward_pallas.2} parent=11 // pred_region
        _
      $region16: #{vae_forward_pallas.2} parent=11 // pred_fallthru
        _
      // Predicated region
      $region17: #{vae_forward_pallas.2} parent=11 // pred_check
        %p237 = pneg %p83
      $region18: #{vae_forward_pallas.2} parent=11 // pred_check_branch
        %239 = sbr.rel (%p237) target = $region20
      $region19: #{vae_forward_pallas.2} parent=11 // pred_region
        _
      $region20: #{vae_forward_pallas.2} parent=11 // pred_fallthru
        _
      // Predicated region
      $region21: #{vae_forward_pallas.2} parent=11 // pred_check
        %p240 = pneg %p104
      $region22: #{vae_forward_pallas.2} parent=11 // pred_check_branch
        %242 = sbr.rel (%p240) target = $region24
      $region23: #{vae_forward_pallas.2} parent=11 // pred_region
        _
      $region24: #{vae_forward_pallas.2} parent=11 // pred_fallthru
        _
      // Predicated region
      $region25: #{vae_forward_pallas.2} parent=11 // pred_check
        %p243 = pneg %p125
      $region26: #{vae_forward_pallas.2} parent=11 // pred_check_branch
        %245 = sbr.rel (%p243) target = $region28
      $region27: #{vae_forward_pallas.2} parent=11 // pred_region
        _
      $region28: #{vae_forward_pallas.2} parent=11 // pred_fallthru
        _
      // Predicated region
      $region29: #{vae_forward_pallas.2} parent=11 // pred_check
        %p246 = pneg %p146
      $region30: #{vae_forward_pallas.2} parent=11 // pred_check_branch
        %248 = sbr.rel (%p246) target = $region32
      $region31: #{vae_forward_pallas.2} parent=11 // pred_region
        _
      $region32: #{vae_forward_pallas.2} parent=11 // pred_fallthru
        _
      // Predicated region
      $region33: #{vae_forward_pallas.2} parent=11 // pred_check
        %p249 = pneg %p167
      $region34: #{vae_forward_pallas.2} parent=11 // pred_check_branch
        %251 = sbr.rel (%p249) target = $region36
      $region35: #{vae_forward_pallas.2} parent=11 // pred_region
        _
      $region36: #{vae_forward_pallas.2} parent=11 // pred_fallthru
        _
    $region12: #{vae_forward_pallas.2} parent=5 // pred_fallthru
      _
    %p252 = scmp.lt.s32.totalorder %s15, 2
    // Predicated region
    $region37: #{vae_forward_pallas.2} parent=5 // pred_check
      %p253 = pneg %p252
    $region38: #{vae_forward_pallas.2} parent=5 // pred_check_branch
      %255 = sbr.rel (%p253) target = $region40
    $region39: #{vae_forward_pallas.2} parent=5 // pred_region
      // Predicated region
      $region41: #{vae_forward_pallas.2} parent=39 // pred_check
        %p256 = pneg %p35
      $region42: #{vae_forward_pallas.2} parent=39 // pred_check_branch
        %258 = sbr.rel (%p256) target = $region44
      $region43: #{vae_forward_pallas.2} parent=39 // pred_region
        %s259 = smul.u32 32, %s15
        %p260 = scmp.lt.s32.totalorder %s259, 63
        %s261 = scalar_select %p260, %s259, 63
        %s262 = smul.addr %s261, 8
        %s263 = scalar_lea.vmem %s0, %s262
        %s264 = smul.u32 32, %s15
      $region44: #{vae_forward_pallas.2} parent=39 // pred_fallthru
        _
    $region40: #{vae_forward_pallas.2} parent=5 // pred_fallthru
      _
    %p265 = scmp.le.s32.totalorder 1, %s15
    %p266 = scmp.lt.s32.totalorder %s15, 3
    %p267 = pnand %p265, %p266
    %p268 = pneg %p267
    // Predicated region
    $region45: #{vae_forward_pallas.2} parent=5 // pred_check
      _
    $region46: #{vae_forward_pallas.2} parent=5 // pred_check_branch
      %270 = sbr.rel (%p267) target = $region48
    $region47: #{vae_forward_pallas.2} parent=5 // pred_region
      %s271 = ssub.s32 %s15, 1
      %s272 = smul.u32 32, %s20
      %p273 = scmp.lt.s32.totalorder %s272, 63
      %s274 = scalar_select %p273, %s272, 63
      %s275 = smul.addr %s274, 8
      %s276 = scalar_lea.vmem %s0, %s275
      %p277 = pneg %p41
      %p278 = pneg %p38
      %p279 = pneg %p62
      %p280 = pneg %p59
      %p281 = pneg %p83
      %p282 = pneg %p80
      %p283 = pneg %p104
      %p284 = pneg %p101
      %p285 = pneg %p125
      %p286 = pneg %p122
      %p287 = pneg %p146
      %p288 = pneg %p143
      %p289 = pneg %p167
      %p290 = pneg %p164
      %p291 = pneg %p193
      %p292 = pneg %p190
      %s293 = smul.u32 32, %s20
      %p294 = scmp.lt.s32.totalorder %s293, 63
      %s295 = scalar_select %p294, %s293, 63
      %s296 = smul.addr %s295, 8
      %s297 = scalar_lea.vmem %s7, %s296
      %p298 = pneg %p219
      %p299 = pneg %p216
      %s300 = smul.u32 32, %s20
      %p301 = scmp.lt.s32.totalorder %s300, 63
      %s302 = scalar_select %p301, %s300, 63
      %s303 = smul.addr %s302, 8
      %s304 = scalar_lea.vmem %s8, %s303
      %s305 = smul.u32 32, %s20
      %p306 = scmp.lt.s32.totalorder %s305, 63
      %s307 = scalar_select %p306, %s305, 63
      %s308 = smul.addr %s307, 8
      %s309 = scalar_lea.vmem %s0, %s308
      %s310 = smul.u32 32, %s20
      %s311 = smul.u32 32, %s20
      %p312 = scmp.lt.s32.totalorder %s311, 63
      %s313 = scalar_select %p312, %s311, 63
      %s314 = smul.addr %s313, 8
      %s315 = scalar_lea.vmem %s7, %s314
      %s316 = smul.u32 32, %s20
      %s317 = smul.u32 32, %s20
      %p318 = scmp.lt.s32.totalorder %s317, 63
      %s319 = scalar_select %p318, %s317, 63
      %s320 = smul.addr %s319, 8
      %s321 = scalar_lea.vmem %s8, %s320
      %s322 = smul.u32 32, %s20
      %v323 = vld [vmem:[%s309] sm:$0xff]
      %v324 = vld [vmem:[%s309 + $0x8] sm:$0xff]
      %v325 = vld [vmem:[%s309 + $0x10] sm:$0xff]
      %v326 = vld [vmem:[%s309 + $0x18] sm:$0xff]
      %v327 = vld [vmem:[%s309 + $0x20] sm:$0xff]
      %v328 = vld [vmem:[%s309 + $0x28] sm:$0xff]
      %v329 = vld [vmem:[%s309 + $0x30] sm:$0xff]
      %v330 = vld [vmem:[%s309 + $0x38] sm:$0xff]
      %v331 = vld [vmem:[%s309 + $0x40] sm:$0xff]
      %v332 = vld [vmem:[%s309 + $0x48] sm:$0xff]
      %v333 = vld [vmem:[%s309 + $0x50] sm:$0xff]
      %v334 = vld [vmem:[%s309 + $0x58] sm:$0xff]
      %v335 = vld [vmem:[%s309 + $0x60] sm:$0xff]
      %v336 = vld [vmem:[%s309 + $0x68] sm:$0xff]
      %v337 = vld [vmem:[%s309 + $0x70] sm:$0xff]
      %v338 = vld [vmem:[%s309 + $0x78] sm:$0xff]
      %v339 = vld [vmem:[%s309 + $0x80] sm:$0xff]
      %v340 = vld [vmem:[%s309 + $0x88] sm:$0xff]
      %v341 = vld [vmem:[%s309 + $0x90] sm:$0xff]
      %v342 = vld [vmem:[%s309 + $0x98] sm:$0xff]
      %v343 = vld [vmem:[%s309 + $0xa0] sm:$0xff]
      %v344 = vld [vmem:[%s309 + $0xa8] sm:$0xff]
      %v345 = vld [vmem:[%s309 + $0xb0] sm:$0xff]
      %v346 = vld [vmem:[%s309 + $0xb8] sm:$0xff]
      %v347 = vld [vmem:[%s309 + $0xc0] sm:$0xff]
      %v348 = vld [vmem:[%s309 + $0xc8] sm:$0xff]
      %v349 = vld [vmem:[%s309 + $0xd0] sm:$0xff]
      %v350 = vld [vmem:[%s309 + $0xd8] sm:$0xff]
      %v351 = vld [vmem:[%s309 + $0xe0] sm:$0xff]
      %v352 = vld [vmem:[%s309 + $0xe8] sm:$0xff]
      %v353 = vld [vmem:[%s309 + $0xf0] sm:$0xff]
      %v354 = vld [vmem:[%s309 + $0xf8] sm:$0xff]
      %v355 = vld [vmem:[%s1] sm:$0xff]
      %v356 = vld [vmem:[%s1 + $0x8] sm:$0xff]
      %v357 = vld [vmem:[%s1 + $0x10] sm:$0xff]
      %v358 = vld [vmem:[%s1 + $0x18] sm:$0xff]
      %v359 = vld [vmem:[%s1 + $0x20] sm:$0xff]
      %v360 = vld [vmem:[%s1 + $0x28] sm:$0xff]
      %v361 = vld [vmem:[%s1 + $0x30] sm:$0xff]
      %v362 = vld [vmem:[%s1 + $0x38] sm:$0xff]
      %v363 = vld [vmem:[%s1 + $0x40] sm:$0xff]
      %v364 = vld [vmem:[%s1 + $0x48] sm:$0xff]
      %v365 = vld [vmem:[%s1 + $0x50] sm:$0xff]
      %v366 = vld [vmem:[%s1 + $0x58] sm:$0xff]
      %v367 = vld [vmem:[%s1 + $0x60] sm:$0xff]
      %v368 = vld [vmem:[%s1 + $0x68] sm:$0xff]
      %v369 = vld [vmem:[%s1 + $0x70] sm:$0xff]
      %v370 = vld [vmem:[%s1 + $0x78] sm:$0xff]
      %v371 = vld [vmem:[%s1 + $0x80] sm:$0xff]
      %v372 = vld [vmem:[%s1 + $0x88] sm:$0xff]
      %v373 = vld [vmem:[%s1 + $0x90] sm:$0xff]
      %v374 = vld [vmem:[%s1 + $0x98] sm:$0xff]
      %v375 = vld [vmem:[%s1 + $0xa0] sm:$0xff]
      %v376 = vld [vmem:[%s1 + $0xa8] sm:$0xff]
      %v377 = vld [vmem:[%s1 + $0xb0] sm:$0xff]
      %v378 = vld [vmem:[%s1 + $0xb8] sm:$0xff]
      %v379 = vld [vmem:[%s1 + $0xc0] sm:$0xff]
      %v380 = vld [vmem:[%s1 + $0xc8] sm:$0xff]
      %v381 = vld [vmem:[%s1 + $0xd0] sm:$0xff]
      %v382 = vld [vmem:[%s1 + $0xd8] sm:$0xff]
      %v383 = vld [vmem:[%s1 + $0xe0] sm:$0xff]
      %v384 = vld [vmem:[%s1 + $0xe8] sm:$0xff]
      %v385 = vld [vmem:[%s1 + $0xf0] sm:$0xff]
      %v386 = vld [vmem:[%s1 + $0xf8] sm:$0xff]
      %v387 = vld [vmem:[%s2] sm:$0x3]
      %v389 = vlaneseq
      %v390 = vshrl.u32 %v389, 7
      %v391 = vsub.s32 0, %v390
      %v392 = vrot.slane %v387, %v391
      %v393 = vlaneseq
      %v394 = vshrl.u32 %v393, 7
      %v395 = vsub.s32 1, %v394
      %v396 = vrot.slane %v387, %v395
      %399 = vmatprep.subr.mxu0 %v356
      %400 = vmatpush1.msra.mxu0 %v355
      %401 = vmatprep.subr.mxu0 %v358
      %402 = vmatpush1.msra.mxu0 %v357
      %403 = vmatprep.subr.mxu0 %v360
      %404 = vmatpush1.msra.mxu0 %v359
      %405 = vmatprep.subr.mxu0 %v362
      %406 = vmatpush1.msra.mxu0 %v361
      %407 = vmatprep.subr.mxu0 %v364
      %408 = vmatpush1.msra.mxu0 %v363
      %409 = vmatprep.subr.mxu0 %v366
      %410 = vmatpush1.msra.mxu0 %v365
      %411 = vmatprep.subr.mxu0 %v368
      %412 = vmatpush1.msra.mxu0 %v367
      %413 = vmatprep.subr.mxu0 %v370
      %414 = vmatpush1.msra.mxu0 %v369
      %415 = vmatprep.subr.mxu0 %v372
      %416 = vmatpush1.msra.mxu0 %v371
      %417 = vmatprep.subr.mxu0 %v374
      %418 = vmatpush1.msra.mxu0 %v373
      %419 = vmatprep.subr.mxu0 %v376
      %420 = vmatpush1.msra.mxu0 %v375
      %421 = vmatprep.subr.mxu0 %v378
      %422 = vmatpush1.msra.mxu0 %v377
      %423 = vmatprep.subr.mxu0 %v380
      %424 = vmatpush1.msra.mxu0 %v379
      %425 = vmatprep.subr.mxu0 %v382
      %426 = vmatpush1.msra.mxu0 %v381
      %427 = vmatprep.subr.mxu0 %v384
      %428 = vmatpush1.msra.mxu0 %v383
      %429 = vmatprep.subr.mxu0 %v386
      %430 = vmatpush1.msra.mxu0 %v385
      %431 = vmatprep.subr.mxu0 0.0
      %432 = vmatpush1.msra.mxu0 0.0
      %433 = vmatprep.subr.mxu0 0.0
      %434 = vmatpush1.msra.mxu0 0.0
      %435 = vmatprep.subr.mxu0 0.0
      %436 = vmatpush1.msra.mxu0 0.0
      %437 = vmatprep.subr.mxu0 0.0
      %438 = vmatpush1.msra.mxu0 0.0
      %439 = vmatprep.subr.mxu0 0.0
      %440 = vmatpush1.msra.mxu0 0.0
      %441 = vmatprep.subr.mxu0 0.0
      %442 = vmatpush1.msra.mxu0 0.0
      %443 = vmatprep.subr.mxu0 0.0
      %444 = vmatpush1.msra.mxu0 0.0
      %445 = vmatprep.subr.mxu0 0.0
      %446 = vmatpush1.msra.mxu0 0.0
      %447 = vmatprep.subr.mxu0 0.0
      %448 = vmatpush1.msra.mxu0 0.0
      %449 = vmatprep.subr.mxu0 0.0
      %450 = vmatpush1.msra.mxu0 0.0
      %451 = vmatprep.subr.mxu0 0.0
      %452 = vmatpush1.msra.mxu0 0.0
      %453 = vmatprep.subr.mxu0 0.0
      %454 = vmatpush1.msra.mxu0 0.0
      %455 = vmatprep.subr.mxu0 0.0
      %456 = vmatpush1.msra.mxu0 0.0
      %457 = vmatprep.subr.mxu0 0.0
      %458 = vmatpush1.msra.mxu0 0.0
      %459 = vmatprep.subr.mxu0 0.0
      %460 = vmatpush1.msra.mxu0 0.0
      %461 = vmatprep.subr.mxu0 0.0
      %462 = vmatpush1.msra.mxu0 0.0
      %463 = vmatprep.mubr.f32.mxu0 0.0
      %464 = vmatmul.mubr.f32.gmra.mrb[0].mxu0 %v323
      %v465 = vpop.f32.mrb[0].mxu0
      %v466 = vadd.f32 %v392, %v465
      %v467 = vpop.f32.mrb[0].mxu0
      %v468 = vadd.f32 %v396, %v467
      %469 = vmatprep.mubr.f32.mxu0 0.0
      %470 = vmatmul.mubr.f32.gmra.mrb[0].mxu0 %v324
      %v471 = vpop.f32.mrb[0].mxu0
      %v472 = vadd.f32 %v392, %v471
      %v473 = vpop.f32.mrb[0].mxu0
      %v474 = vadd.f32 %v396, %v473
      %475 = vmatprep.mubr.f32.mxu0 0.0
      %476 = vmatmul.mubr.f32.gmra.mrb[0].mxu0 %v325
      %v477 = vpop.f32.mrb[0].mxu0
      %v478 = vadd.f32 %v392, %v477
      %v479 = vpop.f32.mrb[0].mxu0
      %v480 = vadd.f32 %v396, %v479
      %481 = vmatprep.mubr.f32.mxu0 0.0
      %482 = vmatmul.mubr.f32.gmra.mrb[0].mxu0 %v326
      %v483 = vpop.f32.mrb[0].mxu0
      %v484 = vadd.f32 %v392, %v483
      %v485 = vpop.f32.mrb[0].mxu0
      %v486 = vadd.f32 %v396, %v485
      %487 = vmatprep.mubr.f32.mxu0 0.0
      %488 = vmatmul.mubr.f32.gmra.mrb[0].mxu0 %v327
      %v489 = vpop.f32.mrb[0].mxu0
      %v490 = vadd.f32 %v392, %v489
      %v491 = vpop.f32.mrb[0].mxu0
      %v492 = vadd.f32 %v396, %v491
      %493 = vmatprep.mubr.f32.mxu0 0.0
      %494 = vmatmul.mubr.f32.gmra.mrb[0].mxu0 %v328
      %v495 = vpop.f32.mrb[0].mxu0
      %v496 = vadd.f32 %v392, %v495
      %v497 = vpop.f32.mrb[0].mxu0
      %v498 = vadd.f32 %v396, %v497
      %499 = vmatprep.mubr.f32.mxu0 0.0
      %500 = vmatmul.mubr.f32.gmra.mrb[0].mxu0 %v329
      %v501 = vpop.f32.mrb[0].mxu0
      %v502 = vadd.f32 %v392, %v501
      %v503 = vpop.f32.mrb[0].mxu0
      %v504 = vadd.f32 %v396, %v503
      %505 = vmatprep.mubr.f32.mxu0 0.0
      %506 = vmatmul.mubr.f32.gmra.mrb[0].mxu0 %v330
      %v507 = vpop.f32.mrb[0].mxu0
      %v508 = vadd.f32 %v392, %v507
      %v509 = vpop.f32.mrb[0].mxu0
      %v510 = vadd.f32 %v396, %v509
      %511 = vmatprep.mubr.f32.mxu0 0.0
      %512 = vmatmul.mubr.f32.gmra.mrb[0].mxu0 %v331
      %v513 = vpop.f32.mrb[0].mxu0
      %v514 = vadd.f32 %v392, %v513
      %v515 = vpop.f32.mrb[0].mxu0
      %v516 = vadd.f32 %v396, %v515
      %517 = vmatprep.mubr.f32.mxu0 0.0
      %518 = vmatmul.mubr.f32.gmra.mrb[0].mxu0 %v332
      %v519 = vpop.f32.mrb[0].mxu0
      %v520 = vadd.f32 %v392, %v519
      %v521 = vpop.f32.mrb[0].mxu0
      %v522 = vadd.f32 %v396, %v521
      %523 = vmatprep.mubr.f32.mxu0 0.0
      %524 = vmatmul.mubr.f32.gmra.mrb[0].mxu0 %v333
      %v525 = vpop.f32.mrb[0].mxu0
      %v526 = vadd.f32 %v392, %v525
      %v527 = vpop.f32.mrb[0].mxu0
      %v528 = vadd.f32 %v396, %v527
      %529 = vmatprep.mubr.f32.mxu0 0.0
      %530 = vmatmul.mubr.f32.gmra.mrb[0].mxu0 %v334
      %v531 = vpop.f32.mrb[0].mxu0
      %v532 = vadd.f32 %v392, %v531
      %v533 = vpop.f32.mrb[0].mxu0
      %v534 = vadd.f32 %v396, %v533
      %535 = vmatprep.mubr.f32.mxu0 0.0
      %536 = vmatmul.mubr.f32.gmra.mrb[0].mxu0 %v335
      %v537 = vpop.f32.mrb[0].mxu0
      %v538 = vadd.f32 %v392, %v537
      %v539 = vpop.f32.mrb[0].mxu0
      %v540 = vadd.f32 %v396, %v539
      %541 = vmatprep.mubr.f32.mxu0 0.0
      %542 = vmatmul.mubr.f32.gmra.mrb[0].mxu0 %v336
      %v543 = vpop.f32.mrb[0].mxu0
      %v544 = vadd.f32 %v392, %v543
      %v545 = vpop.f32.mrb[0].mxu0
      %v546 = vadd.f32 %v396, %v545
      %547 = vmatprep.mubr.f32.mxu0 0.0
      %548 = vmatmul.mubr.f32.gmra.mrb[0].mxu0 %v337
      %v549 = vpop.f32.mrb[0].mxu0
      %v550 = vadd.f32 %v392, %v549
      %v551 = vpop.f32.mrb[0].mxu0
      %v552 = vadd.f32 %v396, %v551
      %553 = vmatprep.mubr.f32.mxu0 0.0
      %554 = vmatmul.mubr.f32.gmra.mrb[0].mxu0 %v338
      %v555 = vpop.f32.mrb[0].mxu0
      %v556 = vadd.f32 %v392, %v555
      %v557 = vpop.f32.mrb[0].mxu0
      %v558 = vadd.f32 %v396, %v557
      %559 = vmatprep.mubr.f32.mxu0 0.0
      %560 = vmatmul.mubr.f32.gmra.mrb[0].mxu0 %v339
      %v561 = vpop.f32.mrb[0].mxu0
      %v562 = vadd.f32 %v392, %v561
      %v563 = vpop.f32.mrb[0].mxu0
      %v564 = vadd.f32 %v396, %v563
      %565 = vmatprep.mubr.f32.mxu0 0.0
      %566 = vmatmul.mubr.f32.gmra.mrb[0].mxu0 %v340
      %v567 = vpop.f32.mrb[0].mxu0
      %v568 = vadd.f32 %v392, %v567
      %v569 = vpop.f32.mrb[0].mxu0
      %v570 = vadd.f32 %v396, %v569
      %571 = vmatprep.mubr.f32.mxu0 0.0
      %572 = vmatmul.mubr.f32.gmra.mrb[0].mxu0 %v341
      %v573 = vpop.f32.mrb[0].mxu0
      %v574 = vadd.f32 %v392, %v573
      %v575 = vpop.f32.mrb[0].mxu0
      %v576 = vadd.f32 %v396, %v575
      %577 = vmatprep.mubr.f32.mxu0 0.0
      %578 = vmatmul.mubr.f32.gmra.mrb[0].mxu0 %v342
      %v579 = vpop.f32.mrb[0].mxu0
      %v580 = vadd.f32 %v392, %v579
      %v581 = vpop.f32.mrb[0].mxu0
      %v582 = vadd.f32 %v396, %v581
      %583 = vmatprep.mubr.f32.mxu0 0.0
      %584 = vmatmul.mubr.f32.gmra.mrb[0].mxu0 %v343
      %v585 = vpop.f32.mrb[0].mxu0
      %v586 = vadd.f32 %v392, %v585
      %v587 = vpop.f32.mrb[0].mxu0
      %v588 = vadd.f32 %v396, %v587
      %589 = vmatprep.mubr.f32.mxu0 0.0
      %590 = vmatmul.mubr.f32.gmra.mrb[0].mxu0 %v344
      %v591 = vpop.f32.mrb[0].mxu0
      %v592 = vadd.f32 %v392, %v591
      %v593 = vpop.f32.mrb[0].mxu0
      %v594 = vadd.f32 %v396, %v593
      %595 = vmatprep.mubr.f32.mxu0 0.0
      %596 = vmatmul.mubr.f32.gmra.mrb[0].mxu0 %v345
      %v597 = vpop.f32.mrb[0].mxu0
      %v598 = vadd.f32 %v392, %v597
      %v599 = vpop.f32.mrb[0].mxu0
      %v600 = vadd.f32 %v396, %v599
      %601 = vmatprep.mubr.f32.mxu0 0.0
      %602 = vmatmul.mubr.f32.gmra.mrb[0].mxu0 %v346
      %v603 = vpop.f32.mrb[0].mxu0
      %v604 = vadd.f32 %v392, %v603
      %v605 = vpop.f32.mrb[0].mxu0
      %v606 = vadd.f32 %v396, %v605
      %607 = vmatprep.mubr.f32.mxu0 0.0
      %608 = vmatmul.mubr.f32.gmra.mrb[0].mxu0 %v347
      %v609 = vpop.f32.mrb[0].mxu0
      %v610 = vadd.f32 %v392, %v609
      %v611 = vpop.f32.mrb[0].mxu0
      %v612 = vadd.f32 %v396, %v611
      %613 = vmatprep.mubr.f32.mxu0 0.0
      %614 = vmatmul.mubr.f32.gmra.mrb[0].mxu0 %v348
      %v615 = vpop.f32.mrb[0].mxu0
      %v616 = vadd.f32 %v392, %v615
      %v617 = vpop.f32.mrb[0].mxu0
      %v618 = vadd.f32 %v396, %v617
      %619 = vmatprep.mubr.f32.mxu0 0.0
      %620 = vmatmul.mubr.f32.gmra.mrb[0].mxu0 %v349
      %v621 = vpop.f32.mrb[0].mxu0
      %v622 = vadd.f32 %v392, %v621
      %v623 = vpop.f32.mrb[0].mxu0
      %v624 = vadd.f32 %v396, %v623
      %625 = vmatprep.mubr.f32.mxu0 0.0
      %626 = vmatmul.mubr.f32.gmra.mrb[0].mxu0 %v350
      %v627 = vpop.f32.mrb[0].mxu0
      %v628 = vadd.f32 %v392, %v627
      %v629 = vpop.f32.mrb[0].mxu0
      %v630 = vadd.f32 %v396, %v629
      %631 = vmatprep.mubr.f32.mxu0 0.0
      %632 = vmatmul.mubr.f32.gmra.mrb[0].mxu0 %v351
      %v633 = vpop.f32.mrb[0].mxu0
      %v634 = vadd.f32 %v392, %v633
      %v635 = vpop.f32.mrb[0].mxu0
      %v636 = vadd.f32 %v396, %v635
      %637 = vmatprep.mubr.f32.mxu0 0.0
      %638 = vmatmul.mubr.f32.gmra.mrb[0].mxu0 %v352
      %v639 = vpop.f32.mrb[0].mxu0
      %v640 = vadd.f32 %v392, %v639
      %v641 = vpop.f32.mrb[0].mxu0
      %v642 = vadd.f32 %v396, %v641
      %643 = vmatprep.mubr.f32.mxu0 0.0
      %644 = vmatmul.mubr.f32.gmra.mrb[0].mxu0 %v353
      %v645 = vpop.f32.mrb[0].mxu0
      %v646 = vadd.f32 %v392, %v645
      %v647 = vpop.f32.mrb[0].mxu0
      %v648 = vadd.f32 %v396, %v647
      %649 = vmatprep.mubr.f32.mxu0 0.0
      %650 = vmatmul.mubr.f32.gmra.mrb[0].mxu0 %v354
      %v651 = vpop.f32.mrb[0].mxu0
      %v652 = vadd.f32 %v392, %v651
      %v653 = vpop.f32.mrb[0].mxu0
      %v654 = vadd.f32 %v396, %v653
      %655 = vdwg.mxu0
      %v656 = vmax.f32 %v466, 0.0
      %v657 = vmax.f32 %v468, 0.0
      %v658 = vmax.f32 %v472, 0.0
      %v659 = vmax.f32 %v474, 0.0
      %v660 = vmax.f32 %v478, 0.0
      %v661 = vmax.f32 %v480, 0.0
      %v662 = vmax.f32 %v484, 0.0
      %v663 = vmax.f32 %v486, 0.0
      %v664 = vmax.f32 %v490, 0.0
      %v665 = vmax.f32 %v492, 0.0
      %v666 = vmax.f32 %v496, 0.0
      %v667 = vmax.f32 %v498, 0.0
      %v668 = vmax.f32 %v502, 0.0
      %v669 = vmax.f32 %v504, 0.0
      %v670 = vmax.f32 %v508, 0.0
      %v671 = vmax.f32 %v510, 0.0
      %v672 = vmax.f32 %v514, 0.0
      %v673 = vmax.f32 %v516, 0.0
      %v674 = vmax.f32 %v520, 0.0
      %v675 = vmax.f32 %v522, 0.0
      %v676 = vmax.f32 %v526, 0.0
      %v677 = vmax.f32 %v528, 0.0
      %v678 = vmax.f32 %v532, 0.0
      %v679 = vmax.f32 %v534, 0.0
      %v680 = vmax.f32 %v538, 0.0
      %v681 = vmax.f32 %v540, 0.0
      %v682 = vmax.f32 %v544, 0.0
      %v683 = vmax.f32 %v546, 0.0
      %v684 = vmax.f32 %v550, 0.0
      %v685 = vmax.f32 %v552, 0.0
      %v686 = vmax.f32 %v556, 0.0
      %v687 = vmax.f32 %v558, 0.0
      %v688 = vmax.f32 %v562, 0.0
      %v689 = vmax.f32 %v564, 0.0
      %v690 = vmax.f32 %v568, 0.0
      %v691 = vmax.f32 %v570, 0.0
      %v692 = vmax.f32 %v574, 0.0
      %v693 = vmax.f32 %v576, 0.0
      %v694 = vmax.f32 %v580, 0.0
      %v695 = vmax.f32 %v582, 0.0
      %v696 = vmax.f32 %v586, 0.0
      %v697 = vmax.f32 %v588, 0.0
      %v698 = vmax.f32 %v592, 0.0
      %v699 = vmax.f32 %v594, 0.0
      %v700 = vmax.f32 %v598, 0.0
      %v701 = vmax.f32 %v600, 0.0
      %v702 = vmax.f32 %v604, 0.0
      %v703 = vmax.f32 %v606, 0.0
      %v704 = vmax.f32 %v610, 0.0
      %v705 = vmax.f32 %v612, 0.0
      %v706 = vmax.f32 %v616, 0.0
      %v707 = vmax.f32 %v618, 0.0
      %v708 = vmax.f32 %v622, 0.0
      %v709 = vmax.f32 %v624, 0.0
      %v710 = vmax.f32 %v628, 0.0
      %v711 = vmax.f32 %v630, 0.0
      %v712 = vmax.f32 %v634, 0.0
      %v713 = vmax.f32 %v636, 0.0
      %v714 = vmax.f32 %v640, 0.0
      %v715 = vmax.f32 %v642, 0.0
      %v716 = vmax.f32 %v646, 0.0
      %v717 = vmax.f32 %v648, 0.0
      %v718 = vmax.f32 %v652, 0.0
      %v719 = vmax.f32 %v654, 0.0
      %v720 = vld [vmem:[%s3] sm:$0xff]
      %v721 = vld [vmem:[%s3 + $0x8] sm:$0xff]
      %v722 = vld [vmem:[%s3 + $0x10] sm:$0xff]
      %v723 = vld [vmem:[%s3 + $0x18] sm:$0xff]
      %v724 = vld [vmem:[%s3 + $0x20] sm:$0xff]
      %v725 = vld [vmem:[%s3 + $0x28] sm:$0xff]
      %v726 = vld [vmem:[%s3 + $0x30] sm:$0xff]
      %v727 = vld [vmem:[%s3 + $0x38] sm:$0xff]
      %v728 = vld [vmem:[%s3 + $0x40] sm:$0xff]
      %v729 = vld [vmem:[%s3 + $0x48] sm:$0xff]
      %v730 = vld [vmem:[%s3 + $0x50] sm:$0xff]
      %v731 = vld [vmem:[%s3 + $0x58] sm:$0xff]
      %v732 = vld [vmem:[%s3 + $0x60] sm:$0xff]
      %v733 = vld [vmem:[%s3 + $0x68] sm:$0xff]
      %v734 = vld [vmem:[%s3 + $0x70] sm:$0xff]
      %v735 = vld [vmem:[%s3 + $0x78] sm:$0xff]
      %v736 = vld [vmem:[%s3 + $0x80] sm:$0xff]
      %v737 = vld [vmem:[%s3 + $0x88] sm:$0xff]
      %v738 = vld [vmem:[%s3 + $0x90] sm:$0xff]
      %v739 = vld [vmem:[%s3 + $0x98] sm:$0xff]
      %v740 = vld [vmem:[%s3 + $0xa0] sm:$0xff]
      %v741 = vld [vmem:[%s3 + $0xa8] sm:$0xff]
      %v742 = vld [vmem:[%s3 + $0xb0] sm:$0xff]
      %v743 = vld [vmem:[%s3 + $0xb8] sm:$0xff]
      %v744 = vld [vmem:[%s3 + $0xc0] sm:$0xff]
      %v745 = vld [vmem:[%s3 + $0xc8] sm:$0xff]
      %v746 = vld [vmem:[%s3 + $0xd0] sm:$0xff]
      %v747 = vld [vmem:[%s3 + $0xd8] sm:$0xff]
      %v748 = vld [vmem:[%s3 + $0xe0] sm:$0xff]
      %v749 = vld [vmem:[%s3 + $0xe8] sm:$0xff]
      %v750 = vld [vmem:[%s3 + $0xf0] sm:$0xff]
      %v751 = vld [vmem:[%s3 + $0xf8] sm:$0xff]
      %v752 = vld [vmem:[%s4] sm:$0x1]
      %v754 = vlaneseq
      %v755 = vshrl.u32 %v754, 7
      %v756 = vsub.s32 0, %v755
      %v757 = vrot.slane %v752, %v756
      %759 = vmatprep.subr.mxu0 0.0
      %760 = vmatpush1.msra.mxu0 %v720
      %761 = vmatprep.subr.mxu0 0.0
      %762 = vmatpush1.msra.mxu0 %v721
      %763 = vmatprep.subr.mxu0 0.0
      %764 = vmatpush1.msra.mxu0 %v722
      %765 = vmatprep.subr.mxu0 0.0
      %766 = vmatpush1.msra.mxu0 %v723
      %767 = vmatprep.subr.mxu0 0.0
      %768 = vmatpush1.msra.mxu0 %v724
      %769 = vmatprep.subr.mxu0 0.0
      %770 = vmatpush1.msra.mxu0 %v725
      %771 = vmatprep.subr.mxu0 0.0
      %772 = vmatpush1.msra.mxu0 %v726
      %773 = vmatprep.subr.mxu0 0.0
      %774 = vmatpush1.msra.mxu0 %v727
      %775 = vmatprep.subr.mxu0 0.0
      %776 = vmatpush1.msra.mxu0 %v728
      %777 = vmatprep.subr.mxu0 0.0
      %778 = vmatpush1.msra.mxu0 %v729
      %779 = vmatprep.subr.mxu0 0.0
      %780 = vmatpush1.msra.mxu0 %v730
      %781 = vmatprep.subr.mxu0 0.0
      %782 = vmatpush1.msra.mxu0 %v731
      %783 = vmatprep.subr.mxu0 0.0
      %784 = vmatpush1.msra.mxu0 %v732
      %785 = vmatprep.subr.mxu0 0.0
      %786 = vmatpush1.msra.mxu0 %v733
      %787 = vmatprep.subr.mxu0 0.0
      %788 = vmatpush1.msra.mxu0 %v734
      %789 = vmatprep.subr.mxu0 0.0
      %790 = vmatpush1.msra.mxu0 %v735
      %791 = vmatprep.subr.mxu0 0.0
      %792 = vmatpush1.msra.mxu0 %v736
      %793 = vmatprep.subr.mxu0 0.0
      %794 = vmatpush1.msra.mxu0 %v737
      %795 = vmatprep.subr.mxu0 0.0
      %796 = vmatpush1.msra.mxu0 %v738
      %797 = vmatprep.subr.mxu0 0.0
      %798 = vmatpush1.msra.mxu0 %v739
      %799 = vmatprep.subr.mxu0 0.0
      %800 = vmatpush1.msra.mxu0 %v740
      %801 = vmatprep.subr.mxu0 0.0
      %802 = vmatpush1.msra.mxu0 %v741
      %803 = vmatprep.subr.mxu0 0.0
      %804 = vmatpush1.msra.mxu0 %v742
      %805 = vmatprep.subr.mxu0 0.0
      %806 = vmatpush1.msra.mxu0 %v743
      %807 = vmatprep.subr.mxu0 0.0
      %808 = vmatpush1.msra.mxu0 %v744
      %809 = vmatprep.subr.mxu0 0.0
      %810 = vmatpush1.msra.mxu0 %v745
      %811 = vmatprep.subr.mxu0 0.0
      %812 = vmatpush1.msra.mxu0 %v746
      %813 = vmatprep.subr.mxu0 0.0
      %814 = vmatpush1.msra.mxu0 %v747
      %815 = vmatprep.subr.mxu0 0.0
      %816 = vmatpush1.msra.mxu0 %v748
      %817 = vmatprep.subr.mxu0 0.0
      %818 = vmatpush1.msra.mxu0 %v749
      %819 = vmatprep.subr.mxu0 0.0
      %820 = vmatpush1.msra.mxu0 %v750
      %821 = vmatprep.subr.mxu0 0.0
      %822 = vmatpush1.msra.mxu0 %v751
      %823 = vmatprep.mubr.f32.mxu0 %v657
      %824 = vmatmul.mubr.f32.gmra.mrb[0].mxu0 %v656
      %v825 = vpop.f32.mrb[0].mxu0
      %v826 = vadd.f32 %v757, %v825
      %v827 = vpop.f32.mrb[0].mxu0
      %828 = vmatprep.mubr.f32.mxu0 %v659
      %829 = vmatmul.mubr.f32.gmra.mrb[0].mxu0 %v658
      %v830 = vpop.f32.mrb[0].mxu0
      %v831 = vadd.f32 %v757, %v830
      %v832 = vpop.f32.mrb[0].mxu0
      %833 = vmatprep.mubr.f32.mxu0 %v661
      %834 = vmatmul.mubr.f32.gmra.mrb[0].mxu0 %v660
      %v835 = vpop.f32.mrb[0].mxu0
      %v836 = vadd.f32 %v757, %v835
      %v837 = vpop.f32.mrb[0].mxu0
      %838 = vmatprep.mubr.f32.mxu0 %v663
      %839 = vmatmul.mubr.f32.gmra.mrb[0].mxu0 %v662
      %v840 = vpop.f32.mrb[0].mxu0
      %v841 = vadd.f32 %v757, %v840
      %v842 = vpop.f32.mrb[0].mxu0
      %843 = vmatprep.mubr.f32.mxu0 %v665
      %844 = vmatmul.mubr.f32.gmra.mrb[0].mxu0 %v664
      %v845 = vpop.f32.mrb[0].mxu0
      %v846 = vadd.f32 %v757, %v845
      %v847 = vpop.f32.mrb[0].mxu0
      %848 = vmatprep.mubr.f32.mxu0 %v667
      %849 = vmatmul.mubr.f32.gmra.mrb[0].mxu0 %v666
      %v850 = vpop.f32.mrb[0].mxu0
      %v851 = vadd.f32 %v757, %v850
      %v852 = vpop.f32.mrb[0].mxu0
      %853 = vmatprep.mubr.f32.mxu0 %v669
      %854 = vmatmul.mubr.f32.gmra.mrb[0].mxu0 %v668
      %v855 = vpop.f32.mrb[0].mxu0
      %v856 = vadd.f32 %v757, %v855
      %v857 = vpop.f32.mrb[0].mxu0
      %858 = vmatprep.mubr.f32.mxu0 %v671
      %859 = vmatmul.mubr.f32.gmra.mrb[0].mxu0 %v670
      %v860 = vpop.f32.mrb[0].mxu0
      %v861 = vadd.f32 %v757, %v860
      %v862 = vpop.f32.mrb[0].mxu0
      %863 = vmatprep.mubr.f32.mxu0 %v673
      %864 = vmatmul.mubr.f32.gmra.mrb[0].mxu0 %v672
      %v865 = vpop.f32.mrb[0].mxu0
      %v866 = vadd.f32 %v757, %v865
      %v867 = vpop.f32.mrb[0].mxu0
      %868 = vmatprep.mubr.f32.mxu0 %v675
      %869 = vmatmul.mubr.f32.gmra.mrb[0].mxu0 %v674
      %v870 = vpop.f32.mrb[0].mxu0
      %v871 = vadd.f32 %v757, %v870
      %v872 = vpop.f32.mrb[0].mxu0
      %873 = vmatprep.mubr.f32.mxu0 %v677
      %874 = vmatmul.mubr.f32.gmra.mrb[0].mxu0 %v676
      %v875 = vpop.f32.mrb[0].mxu0
      %v876 = vadd.f32 %v757, %v875
      %v877 = vpop.f32.mrb[0].mxu0
      %878 = vmatprep.mubr.f32.mxu0 %v679
      %879 = vmatmul.mubr.f32.gmra.mrb[0].mxu0 %v678
      %v880 = vpop.f32.mrb[0].mxu0
      %v881 = vadd.f32 %v757, %v880
      %v882 = vpop.f32.mrb[0].mxu0
      %883 = vmatprep.mubr.f32.mxu0 %v681
      %884 = vmatmul.mubr.f32.gmra.mrb[0].mxu0 %v680
      %v885 = vpop.f32.mrb[0].mxu0
      %v886 = vadd.f32 %v757, %v885
      %v887 = vpop.f32.mrb[0].mxu0
      %888 = vmatprep.mubr.f32.mxu0 %v683
      %889 = vmatmul.mubr.f32.gmra.mrb[0].mxu0 %v682
      %v890 = vpop.f32.mrb[0].mxu0
      %v891 = vadd.f32 %v757, %v890
      %v892 = vpop.f32.mrb[0].mxu0
      %893 = vmatprep.mubr.f32.mxu0 %v685
      %894 = vmatmul.mubr.f32.gmra.mrb[0].mxu0 %v684
      %v895 = vpop.f32.mrb[0].mxu0
      %v896 = vadd.f32 %v757, %v895
      %v897 = vpop.f32.mrb[0].mxu0
      %898 = vmatprep.mubr.f32.mxu0 %v687
      %899 = vmatmul.mubr.f32.gmra.mrb[0].mxu0 %v686
      %v900 = vpop.f32.mrb[0].mxu0
      %v901 = vadd.f32 %v757, %v900
      %v902 = vpop.f32.mrb[0].mxu0
      %903 = vmatprep.mubr.f32.mxu0 %v689
      %904 = vmatmul.mubr.f32.gmra.mrb[0].mxu0 %v688
      %v905 = vpop.f32.mrb[0].mxu0
      %v906 = vadd.f32 %v757, %v905
      %v907 = vpop.f32.mrb[0].mxu0
      %908 = vmatprep.mubr.f32.mxu0 %v691
      %909 = vmatmul.mubr.f32.gmra.mrb[0].mxu0 %v690
      %v910 = vpop.f32.mrb[0].mxu0
      %v911 = vadd.f32 %v757, %v910
      %v912 = vpop.f32.mrb[0].mxu0
      %913 = vmatprep.mubr.f32.mxu0 %v693
      %914 = vmatmul.mubr.f32.gmra.mrb[0].mxu0 %v692
      %v915 = vpop.f32.mrb[0].mxu0
      %v916 = vadd.f32 %v757, %v915
      %v917 = vpop.f32.mrb[0].mxu0
      %918 = vmatprep.mubr.f32.mxu0 %v695
      %919 = vmatmul.mubr.f32.gmra.mrb[0].mxu0 %v694
      %v920 = vpop.f32.mrb[0].mxu0
      %v921 = vadd.f32 %v757, %v920
      %v922 = vpop.f32.mrb[0].mxu0
      %923 = vmatprep.mubr.f32.mxu0 %v697
      %924 = vmatmul.mubr.f32.gmra.mrb[0].mxu0 %v696
      %v925 = vpop.f32.mrb[0].mxu0
      %v926 = vadd.f32 %v757, %v925
      %v927 = vpop.f32.mrb[0].mxu0
      %928 = vmatprep.mubr.f32.mxu0 %v699
      %929 = vmatmul.mubr.f32.gmra.mrb[0].mxu0 %v698
      %v930 = vpop.f32.mrb[0].mxu0
      %v931 = vadd.f32 %v757, %v930
      %v932 = vpop.f32.mrb[0].mxu0
      %933 = vmatprep.mubr.f32.mxu0 %v701
      %934 = vmatmul.mubr.f32.gmra.mrb[0].mxu0 %v700
      %v935 = vpop.f32.mrb[0].mxu0
      %v936 = vadd.f32 %v757, %v935
      %v937 = vpop.f32.mrb[0].mxu0
      %938 = vmatprep.mubr.f32.mxu0 %v703
      %939 = vmatmul.mubr.f32.gmra.mrb[0].mxu0 %v702
      %v940 = vpop.f32.mrb[0].mxu0
      %v941 = vadd.f32 %v757, %v940
      %v942 = vpop.f32.mrb[0].mxu0
      %943 = vmatprep.mubr.f32.mxu0 %v705
      %944 = vmatmul.mubr.f32.gmra.mrb[0].mxu0 %v704
      %v945 = vpop.f32.mrb[0].mxu0
      %v946 = vadd.f32 %v757, %v945
      %v947 = vpop.f32.mrb[0].mxu0
      %948 = vmatprep.mubr.f32.mxu0 %v707
      %949 = vmatmul.mubr.f32.gmra.mrb[0].mxu0 %v706
      %v950 = vpop.f32.mrb[0].mxu0
      %v951 = vadd.f32 %v757, %v950
      %v952 = vpop.f32.mrb[0].mxu0
      %953 = vmatprep.mubr.f32.mxu0 %v709
      %954 = vmatmul.mubr.f32.gmra.mrb[0].mxu0 %v708
      %v955 = vpop.f32.mrb[0].mxu0
      %v956 = vadd.f32 %v757, %v955
      %v957 = vpop.f32.mrb[0].mxu0
      %958 = vmatprep.mubr.f32.mxu0 %v711
      %959 = vmatmul.mubr.f32.gmra.mrb[0].mxu0 %v710
      %v960 = vpop.f32.mrb[0].mxu0
      %v961 = vadd.f32 %v757, %v960
      %v962 = vpop.f32.mrb[0].mxu0
      %963 = vmatprep.mubr.f32.mxu0 %v713
      %964 = vmatmul.mubr.f32.gmra.mrb[0].mxu0 %v712
      %v965 = vpop.f32.mrb[0].mxu0
      %v966 = vadd.f32 %v757, %v965
      %v967 = vpop.f32.mrb[0].mxu0
      %968 = vmatprep.mubr.f32.mxu0 %v715
      %969 = vmatmul.mubr.f32.gmra.mrb[0].mxu0 %v714
      %v970 = vpop.f32.mrb[0].mxu0
      %v971 = vadd.f32 %v757, %v970
      %v972 = vpop.f32.mrb[0].mxu0
      %973 = vmatprep.mubr.f32.mxu0 %v717
      %974 = vmatmul.mubr.f32.gmra.mrb[0].mxu0 %v716
      %v975 = vpop.f32.mrb[0].mxu0
      %v976 = vadd.f32 %v757, %v975
      %v977 = vpop.f32.mrb[0].mxu0
      %978 = vmatprep.mubr.f32.mxu0 %v719
      %979 = vmatmul.mubr.f32.gmra.mrb[0].mxu0 %v718
      %v980 = vpop.f32.mrb[0].mxu0
      %v981 = vadd.f32 %v757, %v980
      %v982 = vpop.f32.mrb[0].mxu0
      %983 = vdwg.mxu0
      %v984 = vld [vmem:[%s5] sm:$0xff]
      %v985 = vld [vmem:[%s5 + $0x8] sm:$0xff]
      %v986 = vld [vmem:[%s5 + $0x10] sm:$0xff]
      %v987 = vld [vmem:[%s5 + $0x18] sm:$0xff]
      %v988 = vld [vmem:[%s5 + $0x20] sm:$0xff]
      %v989 = vld [vmem:[%s5 + $0x28] sm:$0xff]
      %v990 = vld [vmem:[%s5 + $0x30] sm:$0xff]
      %v991 = vld [vmem:[%s5 + $0x38] sm:$0xff]
      %v992 = vld [vmem:[%s5 + $0x40] sm:$0xff]
      %v993 = vld [vmem:[%s5 + $0x48] sm:$0xff]
      %v994 = vld [vmem:[%s5 + $0x50] sm:$0xff]
      %v995 = vld [vmem:[%s5 + $0x58] sm:$0xff]
      %v996 = vld [vmem:[%s5 + $0x60] sm:$0xff]
      %v997 = vld [vmem:[%s5 + $0x68] sm:$0xff]
      %v998 = vld [vmem:[%s5 + $0x70] sm:$0xff]
      %v999 = vld [vmem:[%s5 + $0x78] sm:$0xff]
      %v1000 = vld [vmem:[%s5 + $0x80] sm:$0xff]
      %v1001 = vld [vmem:[%s5 + $0x88] sm:$0xff]
      %v1002 = vld [vmem:[%s5 + $0x90] sm:$0xff]
      %v1003 = vld [vmem:[%s5 + $0x98] sm:$0xff]
      %v1004 = vld [vmem:[%s5 + $0xa0] sm:$0xff]
      %v1005 = vld [vmem:[%s5 + $0xa8] sm:$0xff]
      %v1006 = vld [vmem:[%s5 + $0xb0] sm:$0xff]
      %v1007 = vld [vmem:[%s5 + $0xb8] sm:$0xff]
      %v1008 = vld [vmem:[%s5 + $0xc0] sm:$0xff]
      %v1009 = vld [vmem:[%s5 + $0xc8] sm:$0xff]
      %v1010 = vld [vmem:[%s5 + $0xd0] sm:$0xff]
      %v1011 = vld [vmem:[%s5 + $0xd8] sm:$0xff]
      %v1012 = vld [vmem:[%s5 + $0xe0] sm:$0xff]
      %v1013 = vld [vmem:[%s5 + $0xe8] sm:$0xff]
      %v1014 = vld [vmem:[%s5 + $0xf0] sm:$0xff]
      %v1015 = vld [vmem:[%s5 + $0xf8] sm:$0xff]
      %v1016 = vld [vmem:[%s6] sm:$0x1]
      %v1018 = vlaneseq
      %v1019 = vshrl.u32 %v1018, 7
      %v1020 = vsub.s32 0, %v1019
      %v1021 = vrot.slane %v1016, %v1020
      %1023 = vmatprep.subr.mxu0 0.0
      %1024 = vmatpush1.msra.mxu0 %v984
      %1025 = vmatprep.subr.mxu0 0.0
      %1026 = vmatpush1.msra.mxu0 %v985
      %1027 = vmatprep.subr.mxu0 0.0
      %1028 = vmatpush1.msra.mxu0 %v986
      %1029 = vmatprep.subr.mxu0 0.0
      %1030 = vmatpush1.msra.mxu0 %v987
      %1031 = vmatprep.subr.mxu0 0.0
      %1032 = vmatpush1.msra.mxu0 %v988
      %1033 = vmatprep.subr.mxu0 0.0
      %1034 = vmatpush1.msra.mxu0 %v989
      %1035 = vmatprep.subr.mxu0 0.0
      %1036 = vmatpush1.msra.mxu0 %v990
      %1037 = vmatprep.subr.mxu0 0.0
      %1038 = vmatpush1.msra.mxu0 %v991
      %1039 = vmatprep.subr.mxu0 0.0
      %1040 = vmatpush1.msra.mxu0 %v992
      %1041 = vmatprep.subr.mxu0 0.0
      %1042 = vmatpush1.msra.mxu0 %v993
      %1043 = vmatprep.subr.mxu0 0.0
      %1044 = vmatpush1.msra.mxu0 %v994
      %1045 = vmatprep.subr.mxu0 0.0
      %1046 = vmatpush1.msra.mxu0 %v995
      %1047 = vmatprep.subr.mxu0 0.0
      %1048 = vmatpush1.msra.mxu0 %v996
      %1049 = vmatprep.subr.mxu0 0.0
      %1050 = vmatpush1.msra.mxu0 %v997
      %1051 = vmatprep.subr.mxu0 0.0
      %1052 = vmatpush1.msra.mxu0 %v998
      %1053 = vmatprep.subr.mxu0 0.0
      %1054 = vmatpush1.msra.mxu0 %v999
      %1055 = vmatprep.subr.mxu0 0.0
      %1056 = vmatpush1.msra.mxu0 %v1000
      %1057 = vmatprep.subr.mxu0 0.0
      %1058 = vmatpush1.msra.mxu0 %v1001
      %1059 = vmatprep.subr.mxu0 0.0
      %1060 = vmatpush1.msra.mxu0 %v1002
      %1061 = vmatprep.subr.mxu0 0.0
      %1062 = vmatpush1.msra.mxu0 %v1003
      %1063 = vmatprep.subr.mxu0 0.0
      %1064 = vmatpush1.msra.mxu0 %v1004
      %1065 = vmatprep.subr.mxu0 0.0
      %1066 = vmatpush1.msra.mxu0 %v1005
      %1067 = vmatprep.subr.mxu0 0.0
      %1068 = vmatpush1.msra.mxu0 %v1006
      %1069 = vmatprep.subr.mxu0 0.0
      %1070 = vmatpush1.msra.mxu0 %v1007
      %1071 = vmatprep.subr.mxu0 0.0
      %1072 = vmatpush1.msra.mxu0 %v1008
      %1073 = vmatprep.subr.mxu0 0.0
      %1074 = vmatpush1.msra.mxu0 %v1009
      %1075 = vmatprep.subr.mxu0 0.0
      %1076 = vmatpush1.msra.mxu0 %v1010
      %1077 = vmatprep.subr.mxu0 0.0
      %1078 = vmatpush1.msra.mxu0 %v1011
      %1079 = vmatprep.subr.mxu0 0.0
      %1080 = vmatpush1.msra.mxu0 %v1012
      %1081 = vmatprep.subr.mxu0 0.0
      %1082 = vmatpush1.msra.mxu0 %v1013
      %1083 = vmatprep.subr.mxu0 0.0
      %1084 = vmatpush1.msra.mxu0 %v1014
      %1085 = vmatprep.subr.mxu0 0.0
      %1086 = vmatpush1.msra.mxu0 %v1015
      %1087 = vmatprep.mubr.f32.mxu0 %v657
      %1088 = vmatmul.mubr.f32.gmra.mrb[0].mxu0 %v656
      %v1089 = vpop.f32.mrb[0].mxu0
      %v1090 = vadd.f32 %v1021, %v1089
      %v1091 = vpop.f32.mrb[0].mxu0
      %1092 = vmatprep.mubr.f32.mxu0 %v659
      %1093 = vmatmul.mubr.f32.gmra.mrb[0].mxu0 %v658
      %v1094 = vpop.f32.mrb[0].mxu0
      %v1095 = vadd.f32 %v1021, %v1094
      %v1096 = vpop.f32.mrb[0].mxu0
      %1097 = vmatprep.mubr.f32.mxu0 %v661
      %1098 = vmatmul.mubr.f32.gmra.mrb[0].mxu0 %v660
      %v1099 = vpop.f32.mrb[0].mxu0
      %v1100 = vadd.f32 %v1021, %v1099
      %v1101 = vpop.f32.mrb[0].mxu0
      %1102 = vmatprep.mubr.f32.mxu0 %v663
      %1103 = vmatmul.mubr.f32.gmra.mrb[0].mxu0 %v662
      %v1104 = vpop.f32.mrb[0].mxu0
      %v1105 = vadd.f32 %v1021, %v1104
      %v1106 = vpop.f32.mrb[0].mxu0
      %1107 = vmatprep.mubr.f32.mxu0 %v665
      %1108 = vmatmul.mubr.f32.gmra.mrb[0].mxu0 %v664
      %v1109 = vpop.f32.mrb[0].mxu0
      %v1110 = vadd.f32 %v1021, %v1109
      %v1111 = vpop.f32.mrb[0].mxu0
      %1112 = vmatprep.mubr.f32.mxu0 %v667
      %1113 = vmatmul.mubr.f32.gmra.mrb[0].mxu0 %v666
      %v1114 = vpop.f32.mrb[0].mxu0
      %v1115 = vadd.f32 %v1021, %v1114
      %v1116 = vpop.f32.mrb[0].mxu0
      %1117 = vmatprep.mubr.f32.mxu0 %v669
      %1118 = vmatmul.mubr.f32.gmra.mrb[0].mxu0 %v668
      %v1119 = vpop.f32.mrb[0].mxu0
      %v1120 = vadd.f32 %v1021, %v1119
      %v1121 = vpop.f32.mrb[0].mxu0
      %1122 = vmatprep.mubr.f32.mxu0 %v671
      %1123 = vmatmul.mubr.f32.gmra.mrb[0].mxu0 %v670
      %v1124 = vpop.f32.mrb[0].mxu0
      %v1125 = vadd.f32 %v1021, %v1124
      %v1126 = vpop.f32.mrb[0].mxu0
      %1127 = vmatprep.mubr.f32.mxu0 %v673
      %1128 = vmatmul.mubr.f32.gmra.mrb[0].mxu0 %v672
      %v1129 = vpop.f32.mrb[0].mxu0
      %v1130 = vadd.f32 %v1021, %v1129
      %v1131 = vpop.f32.mrb[0].mxu0
      %1132 = vmatprep.mubr.f32.mxu0 %v675
      %1133 = vmatmul.mubr.f32.gmra.mrb[0].mxu0 %v674
      %v1134 = vpop.f32.mrb[0].mxu0
      %v1135 = vadd.f32 %v1021, %v1134
      %v1136 = vpop.f32.mrb[0].mxu0
      %1137 = vmatprep.mubr.f32.mxu0 %v677
      %1138 = vmatmul.mubr.f32.gmra.mrb[0].mxu0 %v676
      %v1139 = vpop.f32.mrb[0].mxu0
      %v1140 = vadd.f32 %v1021, %v1139
      %v1141 = vpop.f32.mrb[0].mxu0
      %1142 = vmatprep.mubr.f32.mxu0 %v679
      %1143 = vmatmul.mubr.f32.gmra.mrb[0].mxu0 %v678
      %v1144 = vpop.f32.mrb[0].mxu0
      %v1145 = vadd.f32 %v1021, %v1144
      %v1146 = vpop.f32.mrb[0].mxu0
      %1147 = vmatprep.mubr.f32.mxu0 %v681
      %1148 = vmatmul.mubr.f32.gmra.mrb[0].mxu0 %v680
      %v1149 = vpop.f32.mrb[0].mxu0
      %v1150 = vadd.f32 %v1021, %v1149
      %v1151 = vpop.f32.mrb[0].mxu0
      %1152 = vmatprep.mubr.f32.mxu0 %v683
      %1153 = vmatmul.mubr.f32.gmra.mrb[0].mxu0 %v682
      %v1154 = vpop.f32.mrb[0].mxu0
      %v1155 = vadd.f32 %v1021, %v1154
      %v1156 = vpop.f32.mrb[0].mxu0
      %1157 = vmatprep.mubr.f32.mxu0 %v685
      %1158 = vmatmul.mubr.f32.gmra.mrb[0].mxu0 %v684
      %v1159 = vpop.f32.mrb[0].mxu0
      %v1160 = vadd.f32 %v1021, %v1159
      %v1161 = vpop.f32.mrb[0].mxu0
      %1162 = vmatprep.mubr.f32.mxu0 %v687
      %1163 = vmatmul.mubr.f32.gmra.mrb[0].mxu0 %v686
      %v1164 = vpop.f32.mrb[0].mxu0
      %v1165 = vadd.f32 %v1021, %v1164
      %v1166 = vpop.f32.mrb[0].mxu0
      %1167 = vmatprep.mubr.f32.mxu0 %v689
      %1168 = vmatmul.mubr.f32.gmra.mrb[0].mxu0 %v688
      %v1169 = vpop.f32.mrb[0].mxu0
      %v1170 = vadd.f32 %v1021, %v1169
      %v1171 = vpop.f32.mrb[0].mxu0
      %1172 = vmatprep.mubr.f32.mxu0 %v691
      %1173 = vmatmul.mubr.f32.gmra.mrb[0].mxu0 %v690
      %v1174 = vpop.f32.mrb[0].mxu0
      %v1175 = vadd.f32 %v1021, %v1174
      %v1176 = vpop.f32.mrb[0].mxu0
      %1177 = vmatprep.mubr.f32.mxu0 %v693
      %1178 = vmatmul.mubr.f32.gmra.mrb[0].mxu0 %v692
      %v1179 = vpop.f32.mrb[0].mxu0
      %v1180 = vadd.f32 %v1021, %v1179
      %v1181 = vpop.f32.mrb[0].mxu0
      %1182 = vmatprep.mubr.f32.mxu0 %v695
      %1183 = vmatmul.mubr.f32.gmra.mrb[0].mxu0 %v694
      %v1184 = vpop.f32.mrb[0].mxu0
      %v1185 = vadd.f32 %v1021, %v1184
      %v1186 = vpop.f32.mrb[0].mxu0
      %1187 = vmatprep.mubr.f32.mxu0 %v697
      %1188 = vmatmul.mubr.f32.gmra.mrb[0].mxu0 %v696
      %v1189 = vpop.f32.mrb[0].mxu0
      %v1190 = vadd.f32 %v1021, %v1189
      %v1191 = vpop.f32.mrb[0].mxu0
      %1192 = vmatprep.mubr.f32.mxu0 %v699
      %1193 = vmatmul.mubr.f32.gmra.mrb[0].mxu0 %v698
      %v1194 = vpop.f32.mrb[0].mxu0
      %v1195 = vadd.f32 %v1021, %v1194
      %v1196 = vpop.f32.mrb[0].mxu0
      %1197 = vmatprep.mubr.f32.mxu0 %v701
      %1198 = vmatmul.mubr.f32.gmra.mrb[0].mxu0 %v700
      %v1199 = vpop.f32.mrb[0].mxu0
      %v1200 = vadd.f32 %v1021, %v1199
      %v1201 = vpop.f32.mrb[0].mxu0
      %1202 = vmatprep.mubr.f32.mxu0 %v703
      %1203 = vmatmul.mubr.f32.gmra.mrb[0].mxu0 %v702
      %v1204 = vpop.f32.mrb[0].mxu0
      %v1205 = vadd.f32 %v1021, %v1204
      %v1206 = vpop.f32.mrb[0].mxu0
      %1207 = vmatprep.mubr.f32.mxu0 %v705
      %1208 = vmatmul.mubr.f32.gmra.mrb[0].mxu0 %v704
      %v1209 = vpop.f32.mrb[0].mxu0
      %v1210 = vadd.f32 %v1021, %v1209
      %v1211 = vpop.f32.mrb[0].mxu0
      %1212 = vmatprep.mubr.f32.mxu0 %v707
      %1213 = vmatmul.mubr.f32.gmra.mrb[0].mxu0 %v706
      %v1214 = vpop.f32.mrb[0].mxu0
      %v1215 = vadd.f32 %v1021, %v1214
      %v1216 = vpop.f32.mrb[0].mxu0
      %1217 = vmatprep.mubr.f32.mxu0 %v709
      %1218 = vmatmul.mubr.f32.gmra.mrb[0].mxu0 %v708
      %v1219 = vpop.f32.mrb[0].mxu0
      %v1220 = vadd.f32 %v1021, %v1219
      %v1221 = vpop.f32.mrb[0].mxu0
      %1222 = vmatprep.mubr.f32.mxu0 %v711
      %1223 = vmatmul.mubr.f32.gmra.mrb[0].mxu0 %v710
      %v1224 = vpop.f32.mrb[0].mxu0
      %v1225 = vadd.f32 %v1021, %v1224
      %v1226 = vpop.f32.mrb[0].mxu0
      %1227 = vmatprep.mubr.f32.mxu0 %v713
      %1228 = vmatmul.mubr.f32.gmra.mrb[0].mxu0 %v712
      %v1229 = vpop.f32.mrb[0].mxu0
      %v1230 = vadd.f32 %v1021, %v1229
      %v1231 = vpop.f32.mrb[0].mxu0
      %1232 = vmatprep.mubr.f32.mxu0 %v715
      %1233 = vmatmul.mubr.f32.gmra.mrb[0].mxu0 %v714
      %v1234 = vpop.f32.mrb[0].mxu0
      %v1235 = vadd.f32 %v1021, %v1234
      %v1236 = vpop.f32.mrb[0].mxu0
      %1237 = vmatprep.mubr.f32.mxu0 %v717
      %1238 = vmatmul.mubr.f32.gmra.mrb[0].mxu0 %v716
      %v1239 = vpop.f32.mrb[0].mxu0
      %v1240 = vadd.f32 %v1021, %v1239
      %v1241 = vpop.f32.mrb[0].mxu0
      %1242 = vmatprep.mubr.f32.mxu0 %v719
      %1243 = vmatmul.mubr.f32.gmra.mrb[0].mxu0 %v718
      %v1244 = vpop.f32.mrb[0].mxu0
      %v1245 = vadd.f32 %v1021, %v1244
      %v1246 = vpop.f32.mrb[0].mxu0
      %1247 = vdwg.mxu0
      %1248 = vst [vmem:[%s315] sm:$0xff] %v826
      %1249 = vst [vmem:[%s315 + $0x8] sm:$0xff] %v831
      %1250 = vst [vmem:[%s315 + $0x10] sm:$0xff] %v836
      %1251 = vst [vmem:[%s315 + $0x18] sm:$0xff] %v841
      %1252 = vst [vmem:[%s315 + $0x20] sm:$0xff] %v846
      %1253 = vst [vmem:[%s315 + $0x28] sm:$0xff] %v851
      %1254 = vst [vmem:[%s315 + $0x30] sm:$0xff] %v856
      %1255 = vst [vmem:[%s315 + $0x38] sm:$0xff] %v861
      %1256 = vst [vmem:[%s315 + $0x40] sm:$0xff] %v866
      %1257 = vst [vmem:[%s315 + $0x48] sm:$0xff] %v871
      %1258 = vst [vmem:[%s315 + $0x50] sm:$0xff] %v876
      %1259 = vst [vmem:[%s315 + $0x58] sm:$0xff] %v881
      %1260 = vst [vmem:[%s315 + $0x60] sm:$0xff] %v886
      %1261 = vst [vmem:[%s315 + $0x68] sm:$0xff] %v891
      %1262 = vst [vmem:[%s315 + $0x70] sm:$0xff] %v896
      %1263 = vst [vmem:[%s315 + $0x78] sm:$0xff] %v901
      %1264 = vst [vmem:[%s315 + $0x80] sm:$0xff] %v906
      %1265 = vst [vmem:[%s315 + $0x88] sm:$0xff] %v911
      %1266 = vst [vmem:[%s315 + $0x90] sm:$0xff] %v916
      %1267 = vst [vmem:[%s315 + $0x98] sm:$0xff] %v921
      %1268 = vst [vmem:[%s315 + $0xa0] sm:$0xff] %v926
      %1269 = vst [vmem:[%s315 + $0xa8] sm:$0xff] %v931
      %1270 = vst [vmem:[%s315 + $0xb0] sm:$0xff] %v936
      %1271 = vst [vmem:[%s315 + $0xb8] sm:$0xff] %v941
      %1272 = vst [vmem:[%s315 + $0xc0] sm:$0xff] %v946
      %1273 = vst [vmem:[%s315 + $0xc8] sm:$0xff] %v951
      %1274 = vst [vmem:[%s315 + $0xd0] sm:$0xff] %v956
      %1275 = vst [vmem:[%s315 + $0xd8] sm:$0xff] %v961
      %1276 = vst [vmem:[%s315 + $0xe0] sm:$0xff] %v966
      %1277 = vst [vmem:[%s315 + $0xe8] sm:$0xff] %v971
      %1278 = vst [vmem:[%s315 + $0xf0] sm:$0xff] %v976
      %1279 = vst [vmem:[%s315 + $0xf8] sm:$0xff] %v981
      %1280 = vst [vmem:[%s321] sm:$0xff] %v1090
      %1281 = vst [vmem:[%s321 + $0x8] sm:$0xff] %v1095
      %1282 = vst [vmem:[%s321 + $0x10] sm:$0xff] %v1100
      %1283 = vst [vmem:[%s321 + $0x18] sm:$0xff] %v1105
      %1284 = vst [vmem:[%s321 + $0x20] sm:$0xff] %v1110
      %1285 = vst [vmem:[%s321 + $0x28] sm:$0xff] %v1115
      %1286 = vst [vmem:[%s321 + $0x30] sm:$0xff] %v1120
      %1287 = vst [vmem:[%s321 + $0x38] sm:$0xff] %v1125
      %1288 = vst [vmem:[%s321 + $0x40] sm:$0xff] %v1130
      %1289 = vst [vmem:[%s321 + $0x48] sm:$0xff] %v1135
      %1290 = vst [vmem:[%s321 + $0x50] sm:$0xff] %v1140
      %1291 = vst [vmem:[%s321 + $0x58] sm:$0xff] %v1145
      %1292 = vst [vmem:[%s321 + $0x60] sm:$0xff] %v1150
      %1293 = vst [vmem:[%s321 + $0x68] sm:$0xff] %v1155
      %1294 = vst [vmem:[%s321 + $0x70] sm:$0xff] %v1160
      %1295 = vst [vmem:[%s321 + $0x78] sm:$0xff] %v1165
      %1296 = vst [vmem:[%s321 + $0x80] sm:$0xff] %v1170
      %1297 = vst [vmem:[%s321 + $0x88] sm:$0xff] %v1175
      %1298 = vst [vmem:[%s321 + $0x90] sm:$0xff] %v1180
      %1299 = vst [vmem:[%s321 + $0x98] sm:$0xff] %v1185
      %1300 = vst [vmem:[%s321 + $0xa0] sm:$0xff] %v1190
      %1301 = vst [vmem:[%s321 + $0xa8] sm:$0xff] %v1195
      %1302 = vst [vmem:[%s321 + $0xb0] sm:$0xff] %v1200
      %1303 = vst [vmem:[%s321 + $0xb8] sm:$0xff] %v1205
      %1304 = vst [vmem:[%s321 + $0xc0] sm:$0xff] %v1210
      %1305 = vst [vmem:[%s321 + $0xc8] sm:$0xff] %v1215
      %1306 = vst [vmem:[%s321 + $0xd0] sm:$0xff] %v1220
      %1307 = vst [vmem:[%s321 + $0xd8] sm:$0xff] %v1225
      %1308 = vst [vmem:[%s321 + $0xe0] sm:$0xff] %v1230
      %1309 = vst [vmem:[%s321 + $0xe8] sm:$0xff] %v1235
      %1310 = vst [vmem:[%s321 + $0xf0] sm:$0xff] %v1240
      %1311 = vst [vmem:[%s321 + $0xf8] sm:$0xff] %v1245
      %s1312 = smul.u32 32, %s20
      %p1313 = scmp.lt.s32.totalorder %s1312, 63
      %s1314 = scalar_select %p1313, %s1312, 63
      %s1315 = smul.addr %s1314, 8
      %s1316 = scalar_lea.vmem %s7, %s1315
      %s1317 = smul.u32 32, %s20
      %p1318 = scmp.lt.s32.totalorder %s1317, 63
      %s1319 = scalar_select %p1318, %s1317, 63
      %s1320 = smul.addr %s1319, 8
      %s1321 = scalar_lea.vmem %s8, %s1320
      // Predicated region
      $region49: #{vae_forward_pallas.2} parent=47 // pred_check
        %p1322 = pneg %p190
      $region50: #{vae_forward_pallas.2} parent=47 // pred_check_branch
        %1324 = sbr.rel (%p1322) target = $region52
      $region51: #{vae_forward_pallas.2} parent=47 // pred_region
        %s1325 = smul.u32 32, %s20
      $region52: #{vae_forward_pallas.2} parent=47 // pred_fallthru
        _
      // Predicated region
      $region53: #{vae_forward_pallas.2} parent=47 // pred_check
        %p1326 = pneg %p216
      $region54: #{vae_forward_pallas.2} parent=47 // pred_check_branch
        %1328 = sbr.rel (%p1326) target = $region56
      $region55: #{vae_forward_pallas.2} parent=47 // pred_region
        %s1329 = smul.u32 32, %s20
      $region56: #{vae_forward_pallas.2} parent=47 // pred_fallthru
        _
    $region48: #{vae_forward_pallas.2} parent=5 // pred_fallthru
      _
    %p1330 = scmp.le.s32.totalorder 2, %s15
    // Predicated region
    $region57: #{vae_forward_pallas.2} parent=5 // pred_check
      %p1331 = pneg %p1330
    $region58: #{vae_forward_pallas.2} parent=5 // pred_check_branch
      %1333 = sbr.rel (%p1331) target = $region60
    $region59: #{vae_forward_pallas.2} parent=5 // pred_region
      %s1334 = ssub.s32 %s15, 2
      // Predicated region
      $region61: #{vae_forward_pallas.2} parent=59 // pred_check
        %p1335 = pneg %p196
      $region62: #{vae_forward_pallas.2} parent=59 // pred_check_branch
        %1337 = sbr.rel (%p1335) target = $region64
      $region63: #{vae_forward_pallas.2} parent=59 // pred_region
        %s1338 = smul.u32 32, %s21
        %p1339 = scmp.lt.s32.totalorder %s1338, 63
        %s1340 = scalar_select %p1339, %s1338, 63
        %s1341 = smul.addr %s1340, 8
        %s1342 = scalar_lea.vmem %s7, %s1341
      $region64: #{vae_forward_pallas.2} parent=59 // pred_fallthru
        _
      // Predicated region
      $region65: #{vae_forward_pallas.2} parent=59 // pred_check
        %p1343 = pneg %p222
      $region66: #{vae_forward_pallas.2} parent=59 // pred_check_branch
        %1345 = sbr.rel (%p1343) target = $region68
      $region67: #{vae_forward_pallas.2} parent=59 // pred_region
        %s1346 = smul.u32 32, %s21
        %p1347 = scmp.lt.s32.totalorder %s1346, 63
        %s1348 = scalar_select %p1347, %s1346, 63
        %s1349 = smul.addr %s1348, 8
        %s1350 = scalar_lea.vmem %s8, %s1349
      $region68: #{vae_forward_pallas.2} parent=59 // pred_fallthru
        _
    $region60: #{vae_forward_pallas.2} parent=5 // pred_fallthru
      _
  $region6: #{vae_forward_pallas.2} parent=0 // loop_footer
    %s19 = sadd.s32 1, %s15
  $region7: #{vae_forward_pallas.2} parent=0 // loop_footer_branch
    %14 = sbr.rel target = $region3
  $region8: #{vae_forward_pallas.2} parent=0 // loop_exit
    _

// kernel: vae_forward_pallas.3
$region0: #{vae_forward_pallas.3}
  #allocation0 [shape = 'u32[]', space=smem, size = 0x4, offset = 0x4, fixed_abs, tag = 'smem constant byte address 0x4 - core index']
  #allocation1 [shape = 'u32[144,128]{1,0:T(1,128)}', space=vmem, size = 0x12000, scoped, tag = 'internal scratch']
  %s0 = inlined_call_operand.vmem [shape: f32[512,128], index: 0, kind: input, shape index: {}]
  %s1 = inlined_call_operand.vmem [shape: f32[512,128], index: 1, kind: input, shape index: {}]
  %s2 = inlined_call_operand.vmem [shape: f32[512,128], index: 2, kind: input, shape index: {}]
  %s3 = inlined_call_operand.vmem [shape: f32[128,128], index: 3, kind: input, shape index: {}]
  %s4 = inlined_call_operand.vmem [shape: f32[1,128], index: 4, kind: input, shape index: {}]
  %s5 = inlined_call_operand.vmem [shape: f32[128,128], index: 5, kind: input, shape index: {}]
  %s6 = inlined_call_operand.vmem [shape: f32[1,128], index: 6, kind: input, shape index: {}]
  %s7 = inlined_call_operand.vmem [shape: f32[512,128], index: 7, kind: output, shape index: {}]
  %s8 = sld [smem:[#allocation0]]
  $region61: #{vae_forward_pallas.3} parent=0
    _
  %s10 = ssub.s32 1, %s8
  %s11 = scalar_select 0, %s10, %s8
  loop: start=0, step=1, limit=4
  $region2: #{vae_forward_pallas.3} parent=0 // loop_pre_header
    _
  $region3: #{vae_forward_pallas.3} parent=0 // loop_header
    %s13 = sphi 0, %s17
    %p14 = scmp.ge.s32.totalorder %s13, 4
    %s23 = sphi 0, %s25
    %s26 = sphi 0, %s23
    %s27 = sphi 0, %s26
    %s43 = sphi 0, %s27
    %s49 = sphi 0, %s51
    %s52 = sphi 0, %s49
    %s53 = sphi 0, %s52
    %s69 = sphi 0, %s53
    %s75 = sphi 0, %s77
    %s78 = sphi 0, %s75
    %s79 = sphi 0, %s78
    %s95 = sphi 0, %s79
    %s99 = sphi 0, %s99
    %s101 = sphi 0, %s99
    %s102 = sphi 0, %s101
    %s116 = sphi 0, %s102
    %s120 = sphi 0, %s120
    %s122 = sphi 0, %s120
    %s123 = sphi 0, %s122
    %s137 = sphi 0, %s123
    %s141 = sphi 0, %s141
    %s143 = sphi 0, %s141
    %s144 = sphi 0, %s143
    %s158 = sphi 0, %s144
    %s162 = sphi 0, %s162
    %s164 = sphi 0, %s162
    %s165 = sphi 0, %s164
    %s179 = sphi 0, %s165
    %s185 = sphi 0, %s187
    %s188 = sphi 0, %s185
    %s189 = sphi 0, %s188
    %s205 = sphi 0, %s189
  $region4: #{vae_forward_pallas.3} parent=0 // loop_header_branch
    %16 = sbr.rel (%p14) target = $region8
  $region5: #{vae_forward_pallas.3} parent=0 // loop_body
    %s18 = ssub.s32 %s13, 1
    %s19 = ssub.s32 %s13, 2
    %s20 = sadd.s32 %s13, 1
    %s21 = ssub.s32 %s13, %s20
    %p22 = scmp.eq.s32.totalorder %s21, 0
    %s24 = sadd.s32 %s23, 1
    %s25 = scalar_select %p22, %s23, %s24
    %p28 = pneg %p22
    %p29 = scmp.eq.s32.totalorder %s13, 1
    %p30 = por %p28, %p29
    %p31 = scmp.ne.s32.totalorder %s23, %s26
    %p32 = scmp.eq.s32.totalorder %s13, 0
    %p33 = por %p31, %p32
    %p34 = scmp.ne.s32.totalorder %s23, %s26
    %p35 = scmp.eq.s32.totalorder %s18, 1
    %p36 = por %p34, %p35
    %p37 = scmp.ne.s32.totalorder %s26, %s27
    %p38 = scmp.eq.s32.totalorder %s18, 0
    %p39 = por %p37, %p38
    %p40 = scmp.ne.s32.totalorder %s26, %s27
    %p41 = scmp.eq.s32.totalorder %s19, 1
    %p42 = por %p40, %p41
    %p44 = scmp.ne.s32.totalorder %s27, %s43
    %p45 = scmp.eq.s32.totalorder %s19, 0
    %p46 = por %p44, %p45
    %s47 = ssub.s32 %s13, %s20
    %p48 = scmp.eq.s32.totalorder %s47, 0
    %s50 = sadd.s32 %s49, 1
    %s51 = scalar_select %p48, %s49, %s50
    %p54 = pneg %p48
    %p55 = scmp.eq.s32.totalorder %s13, 1
    %p56 = por %p54, %p55
    %p57 = scmp.ne.s32.totalorder %s49, %s52
    %p58 = scmp.eq.s32.totalorder %s13, 0
    %p59 = por %p57, %p58
    %p60 = scmp.ne.s32.totalorder %s49, %s52
    %p61 = scmp.eq.s32.totalorder %s18, 1
    %p62 = por %p60, %p61
    %p63 = scmp.ne.s32.totalorder %s52, %s53
    %p64 = scmp.eq.s32.totalorder %s18, 0
    %p65 = por %p63, %p64
    %p66 = scmp.ne.s32.totalorder %s52, %s53
    %p67 = scmp.eq.s32.totalorder %s19, 1
    %p68 = por %p66, %p67
    %p70 = scmp.ne.s32.totalorder %s53, %s69
    %p71 = scmp.eq.s32.totalorder %s19, 0
    %p72 = por %p70, %p71
    %s73 = ssub.s32 %s13, %s20
    %p74 = scmp.eq.s32.totalorder %s73, 0
    %s76 = sadd.s32 %s75, 1
    %s77 = scalar_select %p74, %s75, %s76
    %p80 = pneg %p74
    %p81 = scmp.eq.s32.totalorder %s13, 1
    %p82 = por %p80, %p81
    %p83 = scmp.ne.s32.totalorder %s75, %s78
    %p84 = scmp.eq.s32.totalorder %s13, 0
    %p85 = por %p83, %p84
    %p86 = scmp.ne.s32.totalorder %s75, %s78
    %p87 = scmp.eq.s32.totalorder %s18, 1
    %p88 = por %p86, %p87
    %p89 = scmp.ne.s32.totalorder %s78, %s79
    %p90 = scmp.eq.s32.totalorder %s18, 0
    %p91 = por %p89, %p90
    %p92 = scmp.ne.s32.totalorder %s78, %s79
    %p93 = scmp.eq.s32.totalorder %s19, 1
    %p94 = por %p92, %p93
    %p96 = scmp.ne.s32.totalorder %s79, %s95
    %p97 = scmp.eq.s32.totalorder %s19, 0
    %p98 = por %p96, %p97
    %s100 = sadd.s32 %s99, 1
    %p103 = scmp.eq.s32.totalorder %s13, 1
    %p104 = scmp.ne.s32.totalorder %s99, %s101
    %p105 = scmp.eq.s32.totalorder %s13, 0
    %p106 = por %p104, %p105
    %p107 = scmp.ne.s32.totalorder %s99, %s101
    %p108 = scmp.eq.s32.totalorder %s18, 1
    %p109 = por %p107, %p108
    %p110 = scmp.ne.s32.totalorder %s101, %s102
    %p111 = scmp.eq.s32.totalorder %s18, 0
    %p112 = por %p110, %p111
    %p113 = scmp.ne.s32.totalorder %s101, %s102
    %p114 = scmp.eq.s32.totalorder %s19, 1
    %p115 = por %p113, %p114
    %p117 = scmp.ne.s32.totalorder %s102, %s116
    %p118 = scmp.eq.s32.totalorder %s19, 0
    %p119 = por %p117, %p118
    %s121 = sadd.s32 %s120, 1
    %p124 = scmp.eq.s32.totalorder %s13, 1
    %p125 = scmp.ne.s32.totalorder %s120, %s122
    %p126 = scmp.eq.s32.totalorder %s13, 0
    %p127 = por %p125, %p126
    %p128 = scmp.ne.s32.totalorder %s120, %s122
    %p129 = scmp.eq.s32.totalorder %s18, 1
    %p130 = por %p128, %p129
    %p131 = scmp.ne.s32.totalorder %s122, %s123
    %p132 = scmp.eq.s32.totalorder %s18, 0
    %p133 = por %p131, %p132
    %p134 = scmp.ne.s32.totalorder %s122, %s123
    %p135 = scmp.eq.s32.totalorder %s19, 1
    %p136 = por %p134, %p135
    %p138 = scmp.ne.s32.totalorder %s123, %s137
    %p139 = scmp.eq.s32.totalorder %s19, 0
    %p140 = por %p138, %p139
    %s142 = sadd.s32 %s141, 1
    %p145 = scmp.eq.s32.totalorder %s13, 1
    %p146 = scmp.ne.s32.totalorder %s141, %s143
    %p147 = scmp.eq.s32.totalorder %s13, 0
    %p148 = por %p146, %p147
    %p149 = scmp.ne.s32.totalorder %s141, %s143
    %p150 = scmp.eq.s32.totalorder %s18, 1
    %p151 = por %p149, %p150
    %p152 = scmp.ne.s32.totalorder %s143, %s144
    %p153 = scmp.eq.s32.totalorder %s18, 0
    %p154 = por %p152, %p153
    %p155 = scmp.ne.s32.totalorder %s143, %s144
    %p156 = scmp.eq.s32.totalorder %s19, 1
    %p157 = por %p155, %p156
    %p159 = scmp.ne.s32.totalorder %s144, %s158
    %p160 = scmp.eq.s32.totalorder %s19, 0
    %p161 = por %p159, %p160
    %s163 = sadd.s32 %s162, 1
    %p166 = scmp.eq.s32.totalorder %s13, 1
    %p167 = scmp.ne.s32.totalorder %s162, %s164
    %p168 = scmp.eq.s32.totalorder %s13, 0
    %p169 = por %p167, %p168
    %p170 = scmp.ne.s32.totalorder %s162, %s164
    %p171 = scmp.eq.s32.totalorder %s18, 1
    %p172 = por %p170, %p171
    %p173 = scmp.ne.s32.totalorder %s164, %s165
    %p174 = scmp.eq.s32.totalorder %s18, 0
    %p175 = por %p173, %p174
    %p176 = scmp.ne.s32.totalorder %s164, %s165
    %p177 = scmp.eq.s32.totalorder %s19, 1
    %p178 = por %p176, %p177
    %p180 = scmp.ne.s32.totalorder %s165, %s179
    %p181 = scmp.eq.s32.totalorder %s19, 0
    %p182 = por %p180, %p181
    %s183 = ssub.s32 %s13, %s20
    %p184 = scmp.eq.s32.totalorder %s183, 0
    %s186 = sadd.s32 %s185, 1
    %s187 = scalar_select %p184, %s185, %s186
    %p190 = pneg %p184
    %p191 = scmp.eq.s32.totalorder %s13, 1
    %p192 = por %p190, %p191
    %p193 = scmp.ne.s32.totalorder %s185, %s188
    %p194 = scmp.eq.s32.totalorder %s13, 0
    %p195 = por %p193, %p194
    %p196 = scmp.ne.s32.totalorder %s185, %s188
    %p197 = scmp.eq.s32.totalorder %s18, 1
    %p198 = por %p196, %p197
    %p199 = scmp.ne.s32.totalorder %s188, %s189
    %p200 = scmp.eq.s32.totalorder %s18, 0
    %p201 = por %p199, %p200
    %p202 = scmp.ne.s32.totalorder %s188, %s189
    %p203 = scmp.eq.s32.totalorder %s19, 1
    %p204 = por %p202, %p203
    %p206 = scmp.ne.s32.totalorder %s189, %s205
    %p207 = scmp.eq.s32.totalorder %s19, 0
    %p208 = por %p206, %p207
    %p209 = scmp.le.s32.totalorder 1, %s13
    %p210 = scmp.lt.s32.totalorder %s13, 3
    %p211 = pnand %p209, %p210
    %p212 = pneg %p211
    // Predicated region
    $region9: #{vae_forward_pallas.3} parent=5 // pred_check
      _
    $region10: #{vae_forward_pallas.3} parent=5 // pred_check_branch
      %214 = sbr.rel (%p211) target = $region12
    $region11: #{vae_forward_pallas.3} parent=5 // pred_region
      %s215 = ssub.s32 %s13, 1
      // Predicated region
      $region13: #{vae_forward_pallas.3} parent=11 // pred_check
        %p216 = pneg %p112
      $region14: #{vae_forward_pallas.3} parent=11 // pred_check_branch
        %218 = sbr.rel (%p216) target = $region16
      $region15: #{vae_forward_pallas.3} parent=11 // pred_region
        _
      $region16: #{vae_forward_pallas.3} parent=11 // pred_fallthru
        _
      // Predicated region
      $region17: #{vae_forward_pallas.3} parent=11 // pred_check
        %p219 = pneg %p133
      $region18: #{vae_forward_pallas.3} parent=11 // pred_check_branch
        %221 = sbr.rel (%p219) target = $region20
      $region19: #{vae_forward_pallas.3} parent=11 // pred_region
        _
      $region20: #{vae_forward_pallas.3} parent=11 // pred_fallthru
        _
      // Predicated region
      $region21: #{vae_forward_pallas.3} parent=11 // pred_check
        %p222 = pneg %p154
      $region22: #{vae_forward_pallas.3} parent=11 // pred_check_branch
        %224 = sbr.rel (%p222) target = $region24
      $region23: #{vae_forward_pallas.3} parent=11 // pred_region
        _
      $region24: #{vae_forward_pallas.3} parent=11 // pred_fallthru
        _
      // Predicated region
      $region25: #{vae_forward_pallas.3} parent=11 // pred_check
        %p225 = pneg %p175
      $region26: #{vae_forward_pallas.3} parent=11 // pred_check_branch
        %227 = sbr.rel (%p225) target = $region28
      $region27: #{vae_forward_pallas.3} parent=11 // pred_region
        _
      $region28: #{vae_forward_pallas.3} parent=11 // pred_fallthru
        _
    $region12: #{vae_forward_pallas.3} parent=5 // pred_fallthru
      _
    %p228 = scmp.lt.s32.totalorder %s13, 2
    // Predicated region
    $region29: #{vae_forward_pallas.3} parent=5 // pred_check
      %p229 = pneg %p228
    $region30: #{vae_forward_pallas.3} parent=5 // pred_check_branch
      %231 = sbr.rel (%p229) target = $region32
    $region31: #{vae_forward_pallas.3} parent=5 // pred_region
      // Predicated region
      $region33: #{vae_forward_pallas.3} parent=31 // pred_check
        %p232 = pneg %p33
      $region34: #{vae_forward_pallas.3} parent=31 // pred_check_branch
        %234 = sbr.rel (%p232) target = $region36
      $region35: #{vae_forward_pallas.3} parent=31 // pred_region
        %s235 = smul.u32 32, %s13
        %p236 = scmp.lt.s32.totalorder %s235, 63
        %s237 = scalar_select %p236, %s235, 63
        %s238 = smul.addr %s237, 8
        %s239 = scalar_lea.vmem %s0, %s238
        %s240 = smul.u32 32, %s13
      $region36: #{vae_forward_pallas.3} parent=31 // pred_fallthru
        _
      // Predicated region
      $region37: #{vae_forward_pallas.3} parent=31 // pred_check
        %p241 = pneg %p59
      $region38: #{vae_forward_pallas.3} parent=31 // pred_check_branch
        %243 = sbr.rel (%p241) target = $region40
      $region39: #{vae_forward_pallas.3} parent=31 // pred_region
        %s244 = smul.u32 32, %s13
        %p245 = scmp.lt.s32.totalorder %s244, 63
        %s246 = scalar_select %p245, %s244, 63
        %s247 = smul.addr %s246, 8
        %s248 = scalar_lea.vmem %s1, %s247
        %s249 = smul.u32 32, %s13
      $region40: #{vae_forward_pallas.3} parent=31 // pred_fallthru
        _
      // Predicated region
      $region41: #{vae_forward_pallas.3} parent=31 // pred_check
        %p250 = pneg %p85
      $region42: #{vae_forward_pallas.3} parent=31 // pred_check_branch
        %252 = sbr.rel (%p250) target = $region44
      $region43: #{vae_forward_pallas.3} parent=31 // pred_region
        %s253 = smul.u32 32, %s13
        %p254 = scmp.lt.s32.totalorder %s253, 63
        %s255 = scalar_select %p254, %s253, 63
        %s256 = smul.addr %s255, 8
        %s257 = scalar_lea.vmem %s2, %s256
        %s258 = smul.u32 32, %s13
      $region44: #{vae_forward_pallas.3} parent=31 // pred_fallthru
        _
    $region32: #{vae_forward_pallas.3} parent=5 // pred_fallthru
      _
    %p259 = scmp.le.s32.totalorder 1, %s13
    %p260 = scmp.lt.s32.totalorder %s13, 3
    %p261 = pnand %p259, %p260
    %p262 = pneg %p261
    // Predicated region
    $region45: #{vae_forward_pallas.3} parent=5 // pred_check
      _
    $region46: #{vae_forward_pallas.3} parent=5 // pred_check_branch
      %264 = sbr.rel (%p261) target = $region48
    $region47: #{vae_forward_pallas.3} parent=5 // pred_region
      %s265 = ssub.s32 %s13, 1
      %s266 = smul.u32 32, %s18
      %p267 = scmp.lt.s32.totalorder %s266, 63
      %s268 = scalar_select %p267, %s266, 63
      %s269 = smul.addr %s268, 8
      %s270 = scalar_lea.vmem %s0, %s269
      %p271 = pneg %p39
      %p272 = pneg %p36
      %s273 = smul.u32 32, %s18
      %p274 = scmp.lt.s32.totalorder %s273, 63
      %s275 = scalar_select %p274, %s273, 63
      %s276 = smul.addr %s275, 8
      %s277 = scalar_lea.vmem %s1, %s276
      %p278 = pneg %p65
      %p279 = pneg %p62
      %s280 = smul.u32 32, %s18
      %p281 = scmp.lt.s32.totalorder %s280, 63
      %s282 = scalar_select %p281, %s280, 63
      %s283 = smul.addr %s282, 8
      %s284 = scalar_lea.vmem %s2, %s283
      %p285 = pneg %p91
      %p286 = pneg %p88
      %p287 = pneg %p112
      %p288 = pneg %p109
      %p289 = pneg %p133
      %p290 = pneg %p130
      %p291 = pneg %p154
      %p292 = pneg %p151
      %p293 = pneg %p175
      %p294 = pneg %p172
      %p295 = pneg %p201
      %p296 = pneg %p198
      %s297 = smul.u32 32, %s18
      %p298 = scmp.lt.s32.totalorder %s297, 63
      %s299 = scalar_select %p298, %s297, 63
      %s300 = smul.addr %s299, 8
      %s301 = scalar_lea.vmem %s7, %s300
      %s302 = smul.u32 32, %s18
      %p303 = scmp.lt.s32.totalorder %s302, 63
      %s304 = scalar_select %p303, %s302, 63
      %s305 = smul.addr %s304, 8
      %s306 = scalar_lea.vmem %s0, %s305
      %s307 = smul.u32 32, %s18
      %s308 = smul.u32 32, %s18
      %p309 = scmp.lt.s32.totalorder %s308, 63
      %s310 = scalar_select %p309, %s308, 63
      %s311 = smul.addr %s310, 8
      %s312 = scalar_lea.vmem %s1, %s311
      %s313 = smul.u32 32, %s18
      %s314 = smul.u32 32, %s18
      %p315 = scmp.lt.s32.totalorder %s314, 63
      %s316 = scalar_select %p315, %s314, 63
      %s317 = smul.addr %s316, 8
      %s318 = scalar_lea.vmem %s2, %s317
      %s319 = smul.u32 32, %s18
      %s320 = smul.u32 32, %s18
      %p321 = scmp.lt.s32.totalorder %s320, 63
      %s322 = scalar_select %p321, %s320, 63
      %s323 = smul.addr %s322, 8
      %s324 = scalar_lea.vmem %s7, %s323
      %s325 = smul.u32 32, %s18
      %v326 = vld [vmem:[%s306] sm:$0xff]
      %v327 = vld [vmem:[%s306 + $0x8] sm:$0xff]
      %v328 = vld [vmem:[%s306 + $0x10] sm:$0xff]
      %v329 = vld [vmem:[%s306 + $0x18] sm:$0xff]
      %v330 = vld [vmem:[%s306 + $0x20] sm:$0xff]
      %v331 = vld [vmem:[%s306 + $0x28] sm:$0xff]
      %v332 = vld [vmem:[%s306 + $0x30] sm:$0xff]
      %v333 = vld [vmem:[%s306 + $0x38] sm:$0xff]
      %v334 = vld [vmem:[%s306 + $0x40] sm:$0xff]
      %v335 = vld [vmem:[%s306 + $0x48] sm:$0xff]
      %v336 = vld [vmem:[%s306 + $0x50] sm:$0xff]
      %v337 = vld [vmem:[%s306 + $0x58] sm:$0xff]
      %v338 = vld [vmem:[%s306 + $0x60] sm:$0xff]
      %v339 = vld [vmem:[%s306 + $0x68] sm:$0xff]
      %v340 = vld [vmem:[%s306 + $0x70] sm:$0xff]
      %v341 = vld [vmem:[%s306 + $0x78] sm:$0xff]
      %v342 = vld [vmem:[%s306 + $0x80] sm:$0xff]
      %v343 = vld [vmem:[%s306 + $0x88] sm:$0xff]
      %v344 = vld [vmem:[%s306 + $0x90] sm:$0xff]
      %v345 = vld [vmem:[%s306 + $0x98] sm:$0xff]
      %v346 = vld [vmem:[%s306 + $0xa0] sm:$0xff]
      %v347 = vld [vmem:[%s306 + $0xa8] sm:$0xff]
      %v348 = vld [vmem:[%s306 + $0xb0] sm:$0xff]
      %v349 = vld [vmem:[%s306 + $0xb8] sm:$0xff]
      %v350 = vld [vmem:[%s306 + $0xc0] sm:$0xff]
      %v351 = vld [vmem:[%s306 + $0xc8] sm:$0xff]
      %v352 = vld [vmem:[%s306 + $0xd0] sm:$0xff]
      %v353 = vld [vmem:[%s306 + $0xd8] sm:$0xff]
      %v354 = vld [vmem:[%s306 + $0xe0] sm:$0xff]
      %v355 = vld [vmem:[%s306 + $0xe8] sm:$0xff]
      %v356 = vld [vmem:[%s306 + $0xf0] sm:$0xff]
      %v357 = vld [vmem:[%s306 + $0xf8] sm:$0xff]
      %v358 = vld [vmem:[%s312] sm:$0xff]
      %v359 = vld [vmem:[%s312 + $0x8] sm:$0xff]
      %v360 = vld [vmem:[%s312 + $0x10] sm:$0xff]
      %v361 = vld [vmem:[%s312 + $0x18] sm:$0xff]
      %v362 = vld [vmem:[%s312 + $0x20] sm:$0xff]
      %v363 = vld [vmem:[%s312 + $0x28] sm:$0xff]
      %v364 = vld [vmem:[%s312 + $0x30] sm:$0xff]
      %v365 = vld [vmem:[%s312 + $0x38] sm:$0xff]
      %v366 = vld [vmem:[%s312 + $0x40] sm:$0xff]
      %v367 = vld [vmem:[%s312 + $0x48] sm:$0xff]
      %v368 = vld [vmem:[%s312 + $0x50] sm:$0xff]
      %v369 = vld [vmem:[%s312 + $0x58] sm:$0xff]
      %v370 = vld [vmem:[%s312 + $0x60] sm:$0xff]
      %v371 = vld [vmem:[%s312 + $0x68] sm:$0xff]
      %v372 = vld [vmem:[%s312 + $0x70] sm:$0xff]
      %v373 = vld [vmem:[%s312 + $0x78] sm:$0xff]
      %v374 = vld [vmem:[%s312 + $0x80] sm:$0xff]
      %v375 = vld [vmem:[%s312 + $0x88] sm:$0xff]
      %v376 = vld [vmem:[%s312 + $0x90] sm:$0xff]
      %v377 = vld [vmem:[%s312 + $0x98] sm:$0xff]
      %v378 = vld [vmem:[%s312 + $0xa0] sm:$0xff]
      %v379 = vld [vmem:[%s312 + $0xa8] sm:$0xff]
      %v380 = vld [vmem:[%s312 + $0xb0] sm:$0xff]
      %v381 = vld [vmem:[%s312 + $0xb8] sm:$0xff]
      %v382 = vld [vmem:[%s312 + $0xc0] sm:$0xff]
      %v383 = vld [vmem:[%s312 + $0xc8] sm:$0xff]
      %v384 = vld [vmem:[%s312 + $0xd0] sm:$0xff]
      %v385 = vld [vmem:[%s312 + $0xd8] sm:$0xff]
      %v386 = vld [vmem:[%s312 + $0xe0] sm:$0xff]
      %v387 = vld [vmem:[%s312 + $0xe8] sm:$0xff]
      %v388 = vld [vmem:[%s312 + $0xf0] sm:$0xff]
      %v389 = vld [vmem:[%s312 + $0xf8] sm:$0xff]
      %v390 = vld [vmem:[%s318] sm:$0xff]
      %v391 = vld [vmem:[%s318 + $0x8] sm:$0xff]
      %v392 = vld [vmem:[%s318 + $0x10] sm:$0xff]
      %v393 = vld [vmem:[%s318 + $0x18] sm:$0xff]
      %v394 = vld [vmem:[%s318 + $0x20] sm:$0xff]
      %v395 = vld [vmem:[%s318 + $0x28] sm:$0xff]
      %v396 = vld [vmem:[%s318 + $0x30] sm:$0xff]
      %v397 = vld [vmem:[%s318 + $0x38] sm:$0xff]
      %v398 = vld [vmem:[%s318 + $0x40] sm:$0xff]
      %v399 = vld [vmem:[%s318 + $0x48] sm:$0xff]
      %v400 = vld [vmem:[%s318 + $0x50] sm:$0xff]
      %v401 = vld [vmem:[%s318 + $0x58] sm:$0xff]
      %v402 = vld [vmem:[%s318 + $0x60] sm:$0xff]
      %v403 = vld [vmem:[%s318 + $0x68] sm:$0xff]
      %v404 = vld [vmem:[%s318 + $0x70] sm:$0xff]
      %v405 = vld [vmem:[%s318 + $0x78] sm:$0xff]
      %v406 = vld [vmem:[%s318 + $0x80] sm:$0xff]
      %v407 = vld [vmem:[%s318 + $0x88] sm:$0xff]
      %v408 = vld [vmem:[%s318 + $0x90] sm:$0xff]
      %v409 = vld [vmem:[%s318 + $0x98] sm:$0xff]
      %v410 = vld [vmem:[%s318 + $0xa0] sm:$0xff]
      %v411 = vld [vmem:[%s318 + $0xa8] sm:$0xff]
      %v412 = vld [vmem:[%s318 + $0xb0] sm:$0xff]
      %v413 = vld [vmem:[%s318 + $0xb8] sm:$0xff]
      %v414 = vld [vmem:[%s318 + $0xc0] sm:$0xff]
      %v415 = vld [vmem:[%s318 + $0xc8] sm:$0xff]
      %v416 = vld [vmem:[%s318 + $0xd0] sm:$0xff]
      %v417 = vld [vmem:[%s318 + $0xd8] sm:$0xff]
      %v418 = vld [vmem:[%s318 + $0xe0] sm:$0xff]
      %v419 = vld [vmem:[%s318 + $0xe8] sm:$0xff]
      %v420 = vld [vmem:[%s318 + $0xf0] sm:$0xff]
      %v421 = vld [vmem:[%s318 + $0xf8] sm:$0xff]
      %v422 = vmul.f32 %v358, 0.5
      %v423 = vmul.f32 %v359, 0.5
      %v424 = vmul.f32 %v360, 0.5
      %v425 = vmul.f32 %v361, 0.5
      %v426 = vmul.f32 %v362, 0.5
      %v427 = vmul.f32 %v363, 0.5
      %v428 = vmul.f32 %v364, 0.5
      %v429 = vmul.f32 %v365, 0.5
      %v430 = vmul.f32 %v366, 0.5
      %v431 = vmul.f32 %v367, 0.5
      %v432 = vmul.f32 %v368, 0.5
      %v433 = vmul.f32 %v369, 0.5
      %v434 = vmul.f32 %v370, 0.5
      %v435 = vmul.f32 %v371, 0.5
      %v436 = vmul.f32 %v372, 0.5
      %v437 = vmul.f32 %v373, 0.5
      %v438 = vmul.f32 %v374, 0.5
      %v439 = vmul.f32 %v375, 0.5
      %v440 = vmul.f32 %v376, 0.5
      %v441 = vmul.f32 %v377, 0.5
      %v442 = vmul.f32 %v378, 0.5
      %v443 = vmul.f32 %v379, 0.5
      %v444 = vmul.f32 %v380, 0.5
      %v445 = vmul.f32 %v381, 0.5
      %v446 = vmul.f32 %v382, 0.5
      %v447 = vmul.f32 %v383, 0.5
      %v448 = vmul.f32 %v384, 0.5
      %v449 = vmul.f32 %v385, 0.5
      %v450 = vmul.f32 %v386, 0.5
      %v451 = vmul.f32 %v387, 0.5
      %v452 = vmul.f32 %v388, 0.5
      %v453 = vmul.f32 %v389, 0.5
      %v454 = vmul.f32 %v422, 1.442695
      %v455 = vpow.pop %v454
      %v456 = vmul.f32 %v423, 1.442695
      %v457 = vpow.pop %v456
      %v458 = vmul.f32 %v424, 1.442695
      %v459 = vpow.pop %v458
      %v460 = vmul.f32 %v425, 1.442695
      %v461 = vpow.pop %v460
      %v462 = vmul.f32 %v426, 1.442695
      %v463 = vpow.pop %v462
      %v464 = vmul.f32 %v427, 1.442695
      %v465 = vpow.pop %v464
      %v466 = vmul.f32 %v428, 1.442695
      %v467 = vpow.pop %v466
      %v468 = vmul.f32 %v429, 1.442695
      %v469 = vpow.pop %v468
      %v470 = vmul.f32 %v430, 1.442695
      %v471 = vpow.pop %v470
      %v472 = vmul.f32 %v431, 1.442695
      %v473 = vpow.pop %v472
      %v474 = vmul.f32 %v432, 1.442695
      %v475 = vpow.pop %v474
      %v476 = vmul.f32 %v433, 1.442695
      %v477 = vpow.pop %v476
      %v478 = vmul.f32 %v434, 1.442695
      %v479 = vpow.pop %v478
      %v480 = vmul.f32 %v435, 1.442695
      %v481 = vpow.pop %v480
      %v482 = vmul.f32 %v436, 1.442695
      %v483 = vpow.pop %v482
      %v484 = vmul.f32 %v437, 1.442695
      %v485 = vpow.pop %v484
      %v486 = vmul.f32 %v438, 1.442695
      %v487 = vpow.pop %v486
      %v488 = vmul.f32 %v439, 1.442695
      %v489 = vpow.pop %v488
      %v490 = vmul.f32 %v440, 1.442695
      %v491 = vpow.pop %v490
      %v492 = vmul.f32 %v441, 1.442695
      %v493 = vpow.pop %v492
      %v494 = vmul.f32 %v442, 1.442695
      %v495 = vpow.pop %v494
      %v496 = vmul.f32 %v443, 1.442695
      %v497 = vpow.pop %v496
      %v498 = vmul.f32 %v444, 1.442695
      %v499 = vpow.pop %v498
      %v500 = vmul.f32 %v445, 1.442695
      %v501 = vpow.pop %v500
      %v502 = vmul.f32 %v446, 1.442695
      %v503 = vpow.pop %v502
      %v504 = vmul.f32 %v447, 1.442695
      %v505 = vpow.pop %v504
      %v506 = vmul.f32 %v448, 1.442695
      %v507 = vpow.pop %v506
      %v508 = vmul.f32 %v449, 1.442695
      %v509 = vpow.pop %v508
      %v510 = vmul.f32 %v450, 1.442695
      %v511 = vpow.pop %v510
      %v512 = vmul.f32 %v451, 1.442695
      %v513 = vpow.pop %v512
      %v514 = vmul.f32 %v452, 1.442695
      %v515 = vpow.pop %v514
      %v516 = vmul.f32 %v453, 1.442695
      %v517 = vpow.pop %v516
      %v518 = vmul.f32 %v390, %v455
      %v519 = vmul.f32 %v391, %v457
      %v520 = vmul.f32 %v392, %v459
      %v521 = vmul.f32 %v393, %v461
      %v522 = vmul.f32 %v394, %v463
      %v523 = vmul.f32 %v395, %v465
      %v524 = vmul.f32 %v396, %v467
      %v525 = vmul.f32 %v397, %v469
      %v526 = vmul.f32 %v398, %v471
      %v527 = vmul.f32 %v399, %v473
      %v528 = vmul.f32 %v400, %v475
      %v529 = vmul.f32 %v401, %v477
      %v530 = vmul.f32 %v402, %v479
      %v531 = vmul.f32 %v403, %v481
      %v532 = vmul.f32 %v404, %v483
      %v533 = vmul.f32 %v405, %v485
      %v534 = vmul.f32 %v406, %v487
      %v535 = vmul.f32 %v407, %v489
      %v536 = vmul.f32 %v408, %v491
      %v537 = vmul.f32 %v409, %v493
      %v538 = vmul.f32 %v410, %v495
      %v539 = vmul.f32 %v411, %v497
      %v540 = vmul.f32 %v412, %v499
      %v541 = vmul.f32 %v413, %v501
      %v542 = vmul.f32 %v414, %v503
      %v543 = vmul.f32 %v415, %v505
      %v544 = vmul.f32 %v416, %v507
      %v545 = vmul.f32 %v417, %v509
      %v546 = vmul.f32 %v418, %v511
      %v547 = vmul.f32 %v419, %v513
      %v548 = vmul.f32 %v420, %v515
      %v549 = vmul.f32 %v421, %v517
      %v550 = vadd.f32 %v326, %v518
      %v551 = vadd.f32 %v327, %v519
      %v552 = vadd.f32 %v328, %v520
      %v553 = vadd.f32 %v329, %v521
      %v554 = vadd.f32 %v330, %v522
      %v555 = vadd.f32 %v331, %v523
      %v556 = vadd.f32 %v332, %v524
      %v557 = vadd.f32 %v333, %v525
      %v558 = vadd.f32 %v334, %v526
      %v559 = vadd.f32 %v335, %v527
      %v560 = vadd.f32 %v336, %v528
      %v561 = vadd.f32 %v337, %v529
      %v562 = vadd.f32 %v338, %v530
      %v563 = vadd.f32 %v339, %v531
      %v564 = vadd.f32 %v340, %v532
      %v565 = vadd.f32 %v341, %v533
      %v566 = vadd.f32 %v342, %v534
      %v567 = vadd.f32 %v343, %v535
      %v568 = vadd.f32 %v344, %v536
      %v569 = vadd.f32 %v345, %v537
      %v570 = vadd.f32 %v346, %v538
      %v571 = vadd.f32 %v347, %v539
      %v572 = vadd.f32 %v348, %v540
      %v573 = vadd.f32 %v349, %v541
      %v574 = vadd.f32 %v350, %v542
      %v575 = vadd.f32 %v351, %v543
      %v576 = vadd.f32 %v352, %v544
      %v577 = vadd.f32 %v353, %v545
      %v578 = vadd.f32 %v354, %v546
      %v579 = vadd.f32 %v355, %v547
      %v580 = vadd.f32 %v356, %v548
      %v581 = vadd.f32 %v357, %v549
      %v582 = vld [vmem:[%s3] sm:$0xff]
      %v583 = vld [vmem:[%s3 + $0x8] sm:$0xff]
      %v584 = vld [vmem:[%s3 + $0x10] sm:$0xff]
      %v585 = vld [vmem:[%s3 + $0x18] sm:$0xff]
      %v586 = vld [vmem:[%s3 + $0x20] sm:$0xff]
      %v587 = vld [vmem:[%s3 + $0x28] sm:$0xff]
      %v588 = vld [vmem:[%s3 + $0x30] sm:$0xff]
      %v589 = vld [vmem:[%s3 + $0x38] sm:$0xff]
      %v590 = vld [vmem:[%s3 + $0x40] sm:$0xff]
      %v591 = vld [vmem:[%s3 + $0x48] sm:$0xff]
      %v592 = vld [vmem:[%s3 + $0x50] sm:$0xff]
      %v593 = vld [vmem:[%s3 + $0x58] sm:$0xff]
      %v594 = vld [vmem:[%s3 + $0x60] sm:$0xff]
      %v595 = vld [vmem:[%s3 + $0x68] sm:$0xff]
      %v596 = vld [vmem:[%s3 + $0x70] sm:$0xff]
      %v597 = vld [vmem:[%s3 + $0x78] sm:$0xff]
      %v598 = vld [vmem:[%s4] sm:$0x1]
      %v600 = vlaneseq
      %v601 = vshrl.u32 %v600, 7
      %v602 = vsub.s32 0, %v601
      %v603 = vrot.slane %v598, %v602
      %605 = vmatprep.subr.mxu0 0.0
      %606 = vmatpush1.msra.mxu0 %v582
      %607 = vmatprep.subr.mxu0 0.0
      %608 = vmatpush1.msra.mxu0 %v583
      %609 = vmatprep.subr.mxu0 0.0
      %610 = vmatpush1.msra.mxu0 %v584
      %611 = vmatprep.subr.mxu0 0.0
      %612 = vmatpush1.msra.mxu0 %v585
      %613 = vmatprep.subr.mxu0 0.0
      %614 = vmatpush1.msra.mxu0 %v586
      %615 = vmatprep.subr.mxu0 0.0
      %616 = vmatpush1.msra.mxu0 %v587
      %617 = vmatprep.subr.mxu0 0.0
      %618 = vmatpush1.msra.mxu0 %v588
      %619 = vmatprep.subr.mxu0 0.0
      %620 = vmatpush1.msra.mxu0 %v589
      %621 = vmatprep.subr.mxu0 0.0
      %622 = vmatpush1.msra.mxu0 %v590
      %623 = vmatprep.subr.mxu0 0.0
      %624 = vmatpush1.msra.mxu0 %v591
      %625 = vmatprep.subr.mxu0 0.0
      %626 = vmatpush1.msra.mxu0 %v592
      %627 = vmatprep.subr.mxu0 0.0
      %628 = vmatpush1.msra.mxu0 %v593
      %629 = vmatprep.subr.mxu0 0.0
      %630 = vmatpush1.msra.mxu0 %v594
      %631 = vmatprep.subr.mxu0 0.0
      %632 = vmatpush1.msra.mxu0 %v595
      %633 = vmatprep.subr.mxu0 0.0
      %634 = vmatpush1.msra.mxu0 %v596
      %635 = vmatprep.subr.mxu0 0.0
      %636 = vmatpush1.msra.mxu0 %v597
      %637 = vmatprep.subr.mxu0 0.0
      %638 = vmatpush1.msra.mxu0 0.0
      %639 = vmatprep.subr.mxu0 0.0
      %640 = vmatpush1.msra.mxu0 0.0
      %641 = vmatprep.subr.mxu0 0.0
      %642 = vmatpush1.msra.mxu0 0.0
      %643 = vmatprep.subr.mxu0 0.0
      %644 = vmatpush1.msra.mxu0 0.0
      %645 = vmatprep.subr.mxu0 0.0
      %646 = vmatpush1.msra.mxu0 0.0
      %647 = vmatprep.subr.mxu0 0.0
      %648 = vmatpush1.msra.mxu0 0.0
      %649 = vmatprep.subr.mxu0 0.0
      %650 = vmatpush1.msra.mxu0 0.0
      %651 = vmatprep.subr.mxu0 0.0
      %652 = vmatpush1.msra.mxu0 0.0
      %653 = vmatprep.subr.mxu0 0.0
      %654 = vmatpush1.msra.mxu0 0.0
      %655 = vmatprep.subr.mxu0 0.0
      %656 = vmatpush1.msra.mxu0 0.0
      %657 = vmatprep.subr.mxu0 0.0
      %658 = vmatpush1.msra.mxu0 0.0
      %659 = vmatprep.subr.mxu0 0.0
      %660 = vmatpush1.msra.mxu0 0.0
      %661 = vmatprep.subr.mxu0 0.0
      %662 = vmatpush1.msra.mxu0 0.0
      %663 = vmatprep.subr.mxu0 0.0
      %664 = vmatpush1.msra.mxu0 0.0
      %665 = vmatprep.subr.mxu0 0.0
      %666 = vmatpush1.msra.mxu0 0.0
      %667 = vmatprep.subr.mxu0 0.0
      %668 = vmatpush1.msra.mxu0 0.0
      %669 = vmatprep.mubr.f32.mxu0 0.0
      %670 = vmatmul.mubr.f32.gmra.mrb[0].mxu0 %v550
      %v671 = vpop.f32.mrb[0].mxu0
      %v672 = vadd.f32 %v603, %v671
      %v673 = vpop.f32.mrb[0].mxu0
      %674 = vmatprep.mubr.f32.mxu0 0.0
      %675 = vmatmul.mubr.f32.gmra.mrb[0].mxu0 %v551
      %v676 = vpop.f32.mrb[0].mxu0
      %v677 = vadd.f32 %v603, %v676
      %v678 = vpop.f32.mrb[0].mxu0
      %679 = vmatprep.mubr.f32.mxu0 0.0
      %680 = vmatmul.mubr.f32.gmra.mrb[0].mxu0 %v552
      %v681 = vpop.f32.mrb[0].mxu0
      %v682 = vadd.f32 %v603, %v681
      %v683 = vpop.f32.mrb[0].mxu0
      %684 = vmatprep.mubr.f32.mxu0 0.0
      %685 = vmatmul.mubr.f32.gmra.mrb[0].mxu0 %v553
      %v686 = vpop.f32.mrb[0].mxu0
      %v687 = vadd.f32 %v603, %v686
      %v688 = vpop.f32.mrb[0].mxu0
      %689 = vmatprep.mubr.f32.mxu0 0.0
      %690 = vmatmul.mubr.f32.gmra.mrb[0].mxu0 %v554
      %v691 = vpop.f32.mrb[0].mxu0
      %v692 = vadd.f32 %v603, %v691
      %v693 = vpop.f32.mrb[0].mxu0
      %694 = vmatprep.mubr.f32.mxu0 0.0
      %695 = vmatmul.mubr.f32.gmra.mrb[0].mxu0 %v555
      %v696 = vpop.f32.mrb[0].mxu0
      %v697 = vadd.f32 %v603, %v696
      %v698 = vpop.f32.mrb[0].mxu0
      %699 = vmatprep.mubr.f32.mxu0 0.0
      %700 = vmatmul.mubr.f32.gmra.mrb[0].mxu0 %v556
      %v701 = vpop.f32.mrb[0].mxu0
      %v702 = vadd.f32 %v603, %v701
      %v703 = vpop.f32.mrb[0].mxu0
      %704 = vmatprep.mubr.f32.mxu0 0.0
      %705 = vmatmul.mubr.f32.gmra.mrb[0].mxu0 %v557
      %v706 = vpop.f32.mrb[0].mxu0
      %v707 = vadd.f32 %v603, %v706
      %v708 = vpop.f32.mrb[0].mxu0
      %709 = vmatprep.mubr.f32.mxu0 0.0
      %710 = vmatmul.mubr.f32.gmra.mrb[0].mxu0 %v558
      %v711 = vpop.f32.mrb[0].mxu0
      %v712 = vadd.f32 %v603, %v711
      %v713 = vpop.f32.mrb[0].mxu0
      %714 = vmatprep.mubr.f32.mxu0 0.0
      %715 = vmatmul.mubr.f32.gmra.mrb[0].mxu0 %v559
      %v716 = vpop.f32.mrb[0].mxu0
      %v717 = vadd.f32 %v603, %v716
      %v718 = vpop.f32.mrb[0].mxu0
      %719 = vmatprep.mubr.f32.mxu0 0.0
      %720 = vmatmul.mubr.f32.gmra.mrb[0].mxu0 %v560
      %v721 = vpop.f32.mrb[0].mxu0
      %v722 = vadd.f32 %v603, %v721
      %v723 = vpop.f32.mrb[0].mxu0
      %724 = vmatprep.mubr.f32.mxu0 0.0
      %725 = vmatmul.mubr.f32.gmra.mrb[0].mxu0 %v561
      %v726 = vpop.f32.mrb[0].mxu0
      %v727 = vadd.f32 %v603, %v726
      %v728 = vpop.f32.mrb[0].mxu0
      %729 = vmatprep.mubr.f32.mxu0 0.0
      %730 = vmatmul.mubr.f32.gmra.mrb[0].mxu0 %v562
      %v731 = vpop.f32.mrb[0].mxu0
      %v732 = vadd.f32 %v603, %v731
      %v733 = vpop.f32.mrb[0].mxu0
      %734 = vmatprep.mubr.f32.mxu0 0.0
      %735 = vmatmul.mubr.f32.gmra.mrb[0].mxu0 %v563
      %v736 = vpop.f32.mrb[0].mxu0
      %v737 = vadd.f32 %v603, %v736
      %v738 = vpop.f32.mrb[0].mxu0
      %739 = vmatprep.mubr.f32.mxu0 0.0
      %740 = vmatmul.mubr.f32.gmra.mrb[0].mxu0 %v564
      %v741 = vpop.f32.mrb[0].mxu0
      %v742 = vadd.f32 %v603, %v741
      %v743 = vpop.f32.mrb[0].mxu0
      %744 = vmatprep.mubr.f32.mxu0 0.0
      %745 = vmatmul.mubr.f32.gmra.mrb[0].mxu0 %v565
      %v746 = vpop.f32.mrb[0].mxu0
      %v747 = vadd.f32 %v603, %v746
      %v748 = vpop.f32.mrb[0].mxu0
      %749 = vmatprep.mubr.f32.mxu0 0.0
      %750 = vmatmul.mubr.f32.gmra.mrb[0].mxu0 %v566
      %v751 = vpop.f32.mrb[0].mxu0
      %v752 = vadd.f32 %v603, %v751
      %v753 = vpop.f32.mrb[0].mxu0
      %754 = vmatprep.mubr.f32.mxu0 0.0
      %755 = vmatmul.mubr.f32.gmra.mrb[0].mxu0 %v567
      %v756 = vpop.f32.mrb[0].mxu0
      %v757 = vadd.f32 %v603, %v756
      %v758 = vpop.f32.mrb[0].mxu0
      %759 = vmatprep.mubr.f32.mxu0 0.0
      %760 = vmatmul.mubr.f32.gmra.mrb[0].mxu0 %v568
      %v761 = vpop.f32.mrb[0].mxu0
      %v762 = vadd.f32 %v603, %v761
      %v763 = vpop.f32.mrb[0].mxu0
      %764 = vmatprep.mubr.f32.mxu0 0.0
      %765 = vmatmul.mubr.f32.gmra.mrb[0].mxu0 %v569
      %v766 = vpop.f32.mrb[0].mxu0
      %v767 = vadd.f32 %v603, %v766
      %v768 = vpop.f32.mrb[0].mxu0
      %769 = vmatprep.mubr.f32.mxu0 0.0
      %770 = vmatmul.mubr.f32.gmra.mrb[0].mxu0 %v570
      %v771 = vpop.f32.mrb[0].mxu0
      %v772 = vadd.f32 %v603, %v771
      %v773 = vpop.f32.mrb[0].mxu0
      %774 = vmatprep.mubr.f32.mxu0 0.0
      %775 = vmatmul.mubr.f32.gmra.mrb[0].mxu0 %v571
      %v776 = vpop.f32.mrb[0].mxu0
      %v777 = vadd.f32 %v603, %v776
      %v778 = vpop.f32.mrb[0].mxu0
      %779 = vmatprep.mubr.f32.mxu0 0.0
      %780 = vmatmul.mubr.f32.gmra.mrb[0].mxu0 %v572
      %v781 = vpop.f32.mrb[0].mxu0
      %v782 = vadd.f32 %v603, %v781
      %v783 = vpop.f32.mrb[0].mxu0
      %784 = vmatprep.mubr.f32.mxu0 0.0
      %785 = vmatmul.mubr.f32.gmra.mrb[0].mxu0 %v573
      %v786 = vpop.f32.mrb[0].mxu0
      %v787 = vadd.f32 %v603, %v786
      %v788 = vpop.f32.mrb[0].mxu0
      %789 = vmatprep.mubr.f32.mxu0 0.0
      %790 = vmatmul.mubr.f32.gmra.mrb[0].mxu0 %v574
      %v791 = vpop.f32.mrb[0].mxu0
      %v792 = vadd.f32 %v603, %v791
      %v793 = vpop.f32.mrb[0].mxu0
      %794 = vmatprep.mubr.f32.mxu0 0.0
      %795 = vmatmul.mubr.f32.gmra.mrb[0].mxu0 %v575
      %v796 = vpop.f32.mrb[0].mxu0
      %v797 = vadd.f32 %v603, %v796
      %v798 = vpop.f32.mrb[0].mxu0
      %799 = vmatprep.mubr.f32.mxu0 0.0
      %800 = vmatmul.mubr.f32.gmra.mrb[0].mxu0 %v576
      %v801 = vpop.f32.mrb[0].mxu0
      %v802 = vadd.f32 %v603, %v801
      %v803 = vpop.f32.mrb[0].mxu0
      %804 = vmatprep.mubr.f32.mxu0 0.0
      %805 = vmatmul.mubr.f32.gmra.mrb[0].mxu0 %v577
      %v806 = vpop.f32.mrb[0].mxu0
      %v807 = vadd.f32 %v603, %v806
      %v808 = vpop.f32.mrb[0].mxu0
      %809 = vmatprep.mubr.f32.mxu0 0.0
      %810 = vmatmul.mubr.f32.gmra.mrb[0].mxu0 %v578
      %v811 = vpop.f32.mrb[0].mxu0
      %v812 = vadd.f32 %v603, %v811
      %v813 = vpop.f32.mrb[0].mxu0
      %814 = vmatprep.mubr.f32.mxu0 0.0
      %815 = vmatmul.mubr.f32.gmra.mrb[0].mxu0 %v579
      %v816 = vpop.f32.mrb[0].mxu0
      %v817 = vadd.f32 %v603, %v816
      %v818 = vpop.f32.mrb[0].mxu0
      %819 = vmatprep.mubr.f32.mxu0 0.0
      %820 = vmatmul.mubr.f32.gmra.mrb[0].mxu0 %v580
      %v821 = vpop.f32.mrb[0].mxu0
      %v822 = vadd.f32 %v603, %v821
      %v823 = vpop.f32.mrb[0].mxu0
      %824 = vmatprep.mubr.f32.mxu0 0.0
      %825 = vmatmul.mubr.f32.gmra.mrb[0].mxu0 %v581
      %v826 = vpop.f32.mrb[0].mxu0
      %v827 = vadd.f32 %v603, %v826
      %v828 = vpop.f32.mrb[0].mxu0
      %829 = vdwg.mxu0
      %v830 = vmax.f32 %v672, 0.0
      %v831 = vmax.f32 %v677, 0.0
      %v832 = vmax.f32 %v682, 0.0
      %v833 = vmax.f32 %v687, 0.0
      %v834 = vmax.f32 %v692, 0.0
      %v835 = vmax.f32 %v697, 0.0
      %v836 = vmax.f32 %v702, 0.0
      %v837 = vmax.f32 %v707, 0.0
      %v838 = vmax.f32 %v712, 0.0
      %v839 = vmax.f32 %v717, 0.0
      %v840 = vmax.f32 %v722, 0.0
      %v841 = vmax.f32 %v727, 0.0
      %v842 = vmax.f32 %v732, 0.0
      %v843 = vmax.f32 %v737, 0.0
      %v844 = vmax.f32 %v742, 0.0
      %v845 = vmax.f32 %v747, 0.0
      %v846 = vmax.f32 %v752, 0.0
      %v847 = vmax.f32 %v757, 0.0
      %v848 = vmax.f32 %v762, 0.0
      %v849 = vmax.f32 %v767, 0.0
      %v850 = vmax.f32 %v772, 0.0
      %v851 = vmax.f32 %v777, 0.0
      %v852 = vmax.f32 %v782, 0.0
      %v853 = vmax.f32 %v787, 0.0
      %v854 = vmax.f32 %v792, 0.0
      %v855 = vmax.f32 %v797, 0.0
      %v856 = vmax.f32 %v802, 0.0
      %v857 = vmax.f32 %v807, 0.0
      %v858 = vmax.f32 %v812, 0.0
      %v859 = vmax.f32 %v817, 0.0
      %v860 = vmax.f32 %v822, 0.0
      %v861 = vmax.f32 %v827, 0.0
      %v862 = vld [vmem:[%s5] sm:$0xff]
      %v863 = vld [vmem:[%s5 + $0x8] sm:$0xff]
      %v864 = vld [vmem:[%s5 + $0x10] sm:$0xff]
      %v865 = vld [vmem:[%s5 + $0x18] sm:$0xff]
      %v866 = vld [vmem:[%s5 + $0x20] sm:$0xff]
      %v867 = vld [vmem:[%s5 + $0x28] sm:$0xff]
      %v868 = vld [vmem:[%s5 + $0x30] sm:$0xff]
      %v869 = vld [vmem:[%s5 + $0x38] sm:$0xff]
      %v870 = vld [vmem:[%s5 + $0x40] sm:$0xff]
      %v871 = vld [vmem:[%s5 + $0x48] sm:$0xff]
      %v872 = vld [vmem:[%s5 + $0x50] sm:$0xff]
      %v873 = vld [vmem:[%s5 + $0x58] sm:$0xff]
      %v874 = vld [vmem:[%s5 + $0x60] sm:$0xff]
      %v875 = vld [vmem:[%s5 + $0x68] sm:$0xff]
      %v876 = vld [vmem:[%s5 + $0x70] sm:$0xff]
      %v877 = vld [vmem:[%s5 + $0x78] sm:$0xff]
      %v878 = vld [vmem:[%s6] sm:$0x1]
      %v880 = vlaneseq
      %v881 = vshrl.u32 %v880, 7
      %v882 = vsub.s32 0, %v881
      %v883 = vrot.slane %v878, %v882
      %885 = vmatprep.subr.mxu0 0.0
      %886 = vmatpush1.msra.mxu0 %v862
      %887 = vmatprep.subr.mxu0 0.0
      %888 = vmatpush1.msra.mxu0 %v863
      %889 = vmatprep.subr.mxu0 0.0
      %890 = vmatpush1.msra.mxu0 %v864
      %891 = vmatprep.subr.mxu0 0.0
      %892 = vmatpush1.msra.mxu0 %v865
      %893 = vmatprep.subr.mxu0 0.0
      %894 = vmatpush1.msra.mxu0 %v866
      %895 = vmatprep.subr.mxu0 0.0
      %896 = vmatpush1.msra.mxu0 %v867
      %897 = vmatprep.subr.mxu0 0.0
      %898 = vmatpush1.msra.mxu0 %v868
      %899 = vmatprep.subr.mxu0 0.0
      %900 = vmatpush1.msra.mxu0 %v869
      %901 = vmatprep.subr.mxu0 0.0
      %902 = vmatpush1.msra.mxu0 %v870
      %903 = vmatprep.subr.mxu0 0.0
      %904 = vmatpush1.msra.mxu0 %v871
      %905 = vmatprep.subr.mxu0 0.0
      %906 = vmatpush1.msra.mxu0 %v872
      %907 = vmatprep.subr.mxu0 0.0
      %908 = vmatpush1.msra.mxu0 %v873
      %909 = vmatprep.subr.mxu0 0.0
      %910 = vmatpush1.msra.mxu0 %v874
      %911 = vmatprep.subr.mxu0 0.0
      %912 = vmatpush1.msra.mxu0 %v875
      %913 = vmatprep.subr.mxu0 0.0
      %914 = vmatpush1.msra.mxu0 %v876
      %915 = vmatprep.subr.mxu0 0.0
      %916 = vmatpush1.msra.mxu0 %v877
      %917 = vmatprep.subr.mxu0 0.0
      %918 = vmatpush1.msra.mxu0 0.0
      %919 = vmatprep.subr.mxu0 0.0
      %920 = vmatpush1.msra.mxu0 0.0
      %921 = vmatprep.subr.mxu0 0.0
      %922 = vmatpush1.msra.mxu0 0.0
      %923 = vmatprep.subr.mxu0 0.0
      %924 = vmatpush1.msra.mxu0 0.0
      %925 = vmatprep.subr.mxu0 0.0
      %926 = vmatpush1.msra.mxu0 0.0
      %927 = vmatprep.subr.mxu0 0.0
      %928 = vmatpush1.msra.mxu0 0.0
      %929 = vmatprep.subr.mxu0 0.0
      %930 = vmatpush1.msra.mxu0 0.0
      %931 = vmatprep.subr.mxu0 0.0
      %932 = vmatpush1.msra.mxu0 0.0
      %933 = vmatprep.subr.mxu0 0.0
      %934 = vmatpush1.msra.mxu0 0.0
      %935 = vmatprep.subr.mxu0 0.0
      %936 = vmatpush1.msra.mxu0 0.0
      %937 = vmatprep.subr.mxu0 0.0
      %938 = vmatpush1.msra.mxu0 0.0
      %939 = vmatprep.subr.mxu0 0.0
      %940 = vmatpush1.msra.mxu0 0.0
      %941 = vmatprep.subr.mxu0 0.0
      %942 = vmatpush1.msra.mxu0 0.0
      %943 = vmatprep.subr.mxu0 0.0
      %944 = vmatpush1.msra.mxu0 0.0
      %945 = vmatprep.subr.mxu0 0.0
      %946 = vmatpush1.msra.mxu0 0.0
      %947 = vmatprep.subr.mxu0 0.0
      %948 = vmatpush1.msra.mxu0 0.0
      %949 = vmatprep.mubr.f32.mxu0 0.0
      %950 = vmatmul.mubr.f32.gmra.mrb[0].mxu0 %v830
      %v951 = vpop.f32.mrb[0].mxu0
      %v952 = vadd.f32 %v883, %v951
      %v953 = vpop.f32.mrb[0].mxu0
      %954 = vmatprep.mubr.f32.mxu0 0.0
      %955 = vmatmul.mubr.f32.gmra.mrb[0].mxu0 %v831
      %v956 = vpop.f32.mrb[0].mxu0
      %v957 = vadd.f32 %v883, %v956
      %v958 = vpop.f32.mrb[0].mxu0
      %959 = vmatprep.mubr.f32.mxu0 0.0
      %960 = vmatmul.mubr.f32.gmra.mrb[0].mxu0 %v832
      %v961 = vpop.f32.mrb[0].mxu0
      %v962 = vadd.f32 %v883, %v961
      %v963 = vpop.f32.mrb[0].mxu0
      %964 = vmatprep.mubr.f32.mxu0 0.0
      %965 = vmatmul.mubr.f32.gmra.mrb[0].mxu0 %v833
      %v966 = vpop.f32.mrb[0].mxu0
      %v967 = vadd.f32 %v883, %v966
      %v968 = vpop.f32.mrb[0].mxu0
      %969 = vmatprep.mubr.f32.mxu0 0.0
      %970 = vmatmul.mubr.f32.gmra.mrb[0].mxu0 %v834
      %v971 = vpop.f32.mrb[0].mxu0
      %v972 = vadd.f32 %v883, %v971
      %v973 = vpop.f32.mrb[0].mxu0
      %974 = vmatprep.mubr.f32.mxu0 0.0
      %975 = vmatmul.mubr.f32.gmra.mrb[0].mxu0 %v835
      %v976 = vpop.f32.mrb[0].mxu0
      %v977 = vadd.f32 %v883, %v976
      %v978 = vpop.f32.mrb[0].mxu0
      %979 = vmatprep.mubr.f32.mxu0 0.0
      %980 = vmatmul.mubr.f32.gmra.mrb[0].mxu0 %v836
      %v981 = vpop.f32.mrb[0].mxu0
      %v982 = vadd.f32 %v883, %v981
      %v983 = vpop.f32.mrb[0].mxu0
      %984 = vmatprep.mubr.f32.mxu0 0.0
      %985 = vmatmul.mubr.f32.gmra.mrb[0].mxu0 %v837
      %v986 = vpop.f32.mrb[0].mxu0
      %v987 = vadd.f32 %v883, %v986
      %v988 = vpop.f32.mrb[0].mxu0
      %989 = vmatprep.mubr.f32.mxu0 0.0
      %990 = vmatmul.mubr.f32.gmra.mrb[0].mxu0 %v838
      %v991 = vpop.f32.mrb[0].mxu0
      %v992 = vadd.f32 %v883, %v991
      %v993 = vpop.f32.mrb[0].mxu0
      %994 = vmatprep.mubr.f32.mxu0 0.0
      %995 = vmatmul.mubr.f32.gmra.mrb[0].mxu0 %v839
      %v996 = vpop.f32.mrb[0].mxu0
      %v997 = vadd.f32 %v883, %v996
      %v998 = vpop.f32.mrb[0].mxu0
      %999 = vmatprep.mubr.f32.mxu0 0.0
      %1000 = vmatmul.mubr.f32.gmra.mrb[0].mxu0 %v840
      %v1001 = vpop.f32.mrb[0].mxu0
      %v1002 = vadd.f32 %v883, %v1001
      %v1003 = vpop.f32.mrb[0].mxu0
      %1004 = vmatprep.mubr.f32.mxu0 0.0
      %1005 = vmatmul.mubr.f32.gmra.mrb[0].mxu0 %v841
      %v1006 = vpop.f32.mrb[0].mxu0
      %v1007 = vadd.f32 %v883, %v1006
      %v1008 = vpop.f32.mrb[0].mxu0
      %1009 = vmatprep.mubr.f32.mxu0 0.0
      %1010 = vmatmul.mubr.f32.gmra.mrb[0].mxu0 %v842
      %v1011 = vpop.f32.mrb[0].mxu0
      %v1012 = vadd.f32 %v883, %v1011
      %v1013 = vpop.f32.mrb[0].mxu0
      %1014 = vmatprep.mubr.f32.mxu0 0.0
      %1015 = vmatmul.mubr.f32.gmra.mrb[0].mxu0 %v843
      %v1016 = vpop.f32.mrb[0].mxu0
      %v1017 = vadd.f32 %v883, %v1016
      %v1018 = vpop.f32.mrb[0].mxu0
      %1019 = vmatprep.mubr.f32.mxu0 0.0
      %1020 = vmatmul.mubr.f32.gmra.mrb[0].mxu0 %v844
      %v1021 = vpop.f32.mrb[0].mxu0
      %v1022 = vadd.f32 %v883, %v1021
      %v1023 = vpop.f32.mrb[0].mxu0
      %1024 = vmatprep.mubr.f32.mxu0 0.0
      %1025 = vmatmul.mubr.f32.gmra.mrb[0].mxu0 %v845
      %v1026 = vpop.f32.mrb[0].mxu0
      %v1027 = vadd.f32 %v883, %v1026
      %v1028 = vpop.f32.mrb[0].mxu0
      %1029 = vmatprep.mubr.f32.mxu0 0.0
      %1030 = vmatmul.mubr.f32.gmra.mrb[0].mxu0 %v846
      %v1031 = vpop.f32.mrb[0].mxu0
      %v1032 = vadd.f32 %v883, %v1031
      %v1033 = vpop.f32.mrb[0].mxu0
      %1034 = vmatprep.mubr.f32.mxu0 0.0
      %1035 = vmatmul.mubr.f32.gmra.mrb[0].mxu0 %v847
      %v1036 = vpop.f32.mrb[0].mxu0
      %v1037 = vadd.f32 %v883, %v1036
      %v1038 = vpop.f32.mrb[0].mxu0
      %1039 = vmatprep.mubr.f32.mxu0 0.0
      %1040 = vmatmul.mubr.f32.gmra.mrb[0].mxu0 %v848
      %v1041 = vpop.f32.mrb[0].mxu0
      %v1042 = vadd.f32 %v883, %v1041
      %v1043 = vpop.f32.mrb[0].mxu0
      %1044 = vmatprep.mubr.f32.mxu0 0.0
      %1045 = vmatmul.mubr.f32.gmra.mrb[0].mxu0 %v849
      %v1046 = vpop.f32.mrb[0].mxu0
      %v1047 = vadd.f32 %v883, %v1046
      %v1048 = vpop.f32.mrb[0].mxu0
      %1049 = vmatprep.mubr.f32.mxu0 0.0
      %1050 = vmatmul.mubr.f32.gmra.mrb[0].mxu0 %v850
      %v1051 = vpop.f32.mrb[0].mxu0
      %v1052 = vadd.f32 %v883, %v1051
      %v1053 = vpop.f32.mrb[0].mxu0
      %1054 = vmatprep.mubr.f32.mxu0 0.0
      %1055 = vmatmul.mubr.f32.gmra.mrb[0].mxu0 %v851
      %v1056 = vpop.f32.mrb[0].mxu0
      %v1057 = vadd.f32 %v883, %v1056
      %v1058 = vpop.f32.mrb[0].mxu0
      %1059 = vmatprep.mubr.f32.mxu0 0.0
      %1060 = vmatmul.mubr.f32.gmra.mrb[0].mxu0 %v852
      %v1061 = vpop.f32.mrb[0].mxu0
      %v1062 = vadd.f32 %v883, %v1061
      %v1063 = vpop.f32.mrb[0].mxu0
      %1064 = vmatprep.mubr.f32.mxu0 0.0
      %1065 = vmatmul.mubr.f32.gmra.mrb[0].mxu0 %v853
      %v1066 = vpop.f32.mrb[0].mxu0
      %v1067 = vadd.f32 %v883, %v1066
      %v1068 = vpop.f32.mrb[0].mxu0
      %1069 = vmatprep.mubr.f32.mxu0 0.0
      %1070 = vmatmul.mubr.f32.gmra.mrb[0].mxu0 %v854
      %v1071 = vpop.f32.mrb[0].mxu0
      %v1072 = vadd.f32 %v883, %v1071
      %v1073 = vpop.f32.mrb[0].mxu0
      %1074 = vmatprep.mubr.f32.mxu0 0.0
      %1075 = vmatmul.mubr.f32.gmra.mrb[0].mxu0 %v855
      %v1076 = vpop.f32.mrb[0].mxu0
      %v1077 = vadd.f32 %v883, %v1076
      %v1078 = vpop.f32.mrb[0].mxu0
      %1079 = vmatprep.mubr.f32.mxu0 0.0
      %1080 = vmatmul.mubr.f32.gmra.mrb[0].mxu0 %v856
      %v1081 = vpop.f32.mrb[0].mxu0
      %v1082 = vadd.f32 %v883, %v1081
      %v1083 = vpop.f32.mrb[0].mxu0
      %1084 = vmatprep.mubr.f32.mxu0 0.0
      %1085 = vmatmul.mubr.f32.gmra.mrb[0].mxu0 %v857
      %v1086 = vpop.f32.mrb[0].mxu0
      %v1087 = vadd.f32 %v883, %v1086
      %v1088 = vpop.f32.mrb[0].mxu0
      %1089 = vmatprep.mubr.f32.mxu0 0.0
      %1090 = vmatmul.mubr.f32.gmra.mrb[0].mxu0 %v858
      %v1091 = vpop.f32.mrb[0].mxu0
      %v1092 = vadd.f32 %v883, %v1091
      %v1093 = vpop.f32.mrb[0].mxu0
      %1094 = vmatprep.mubr.f32.mxu0 0.0
      %1095 = vmatmul.mubr.f32.gmra.mrb[0].mxu0 %v859
      %v1096 = vpop.f32.mrb[0].mxu0
      %v1097 = vadd.f32 %v883, %v1096
      %v1098 = vpop.f32.mrb[0].mxu0
      %1099 = vmatprep.mubr.f32.mxu0 0.0
      %1100 = vmatmul.mubr.f32.gmra.mrb[0].mxu0 %v860
      %v1101 = vpop.f32.mrb[0].mxu0
      %v1102 = vadd.f32 %v883, %v1101
      %v1103 = vpop.f32.mrb[0].mxu0
      %1104 = vmatprep.mubr.f32.mxu0 0.0
      %1105 = vmatmul.mubr.f32.gmra.mrb[0].mxu0 %v861
      %v1106 = vpop.f32.mrb[0].mxu0
      %v1107 = vadd.f32 %v883, %v1106
      %v1108 = vpop.f32.mrb[0].mxu0
      %1109 = vdwg.mxu0
      %v1110 = vtanh.pop %v952
      %v1111 = vtanh.pop %v957
      %v1112 = vtanh.pop %v962
      %v1113 = vtanh.pop %v967
      %v1114 = vtanh.pop %v972
      %v1115 = vtanh.pop %v977
      %v1116 = vtanh.pop %v982
      %v1117 = vtanh.pop %v987
      %v1118 = vtanh.pop %v992
      %v1119 = vtanh.pop %v997
      %v1120 = vtanh.pop %v1002
      %v1121 = vtanh.pop %v1007
      %v1122 = vtanh.pop %v1012
      %v1123 = vtanh.pop %v1017
      %v1124 = vtanh.pop %v1022
      %v1125 = vtanh.pop %v1027
      %v1126 = vtanh.pop %v1032
      %v1127 = vtanh.pop %v1037
      %v1128 = vtanh.pop %v1042
      %v1129 = vtanh.pop %v1047
      %v1130 = vtanh.pop %v1052
      %v1131 = vtanh.pop %v1057
      %v1132 = vtanh.pop %v1062
      %v1133 = vtanh.pop %v1067
      %v1134 = vtanh.pop %v1072
      %v1135 = vtanh.pop %v1077
      %v1136 = vtanh.pop %v1082
      %v1137 = vtanh.pop %v1087
      %v1138 = vtanh.pop %v1092
      %v1139 = vtanh.pop %v1097
      %v1140 = vtanh.pop %v1102
      %v1141 = vtanh.pop %v1107
      %1142 = vst [vmem:[%s324] sm:$0xff] %v1110
      %1143 = vst [vmem:[%s324 + $0x8] sm:$0xff] %v1111
      %1144 = vst [vmem:[%s324 + $0x10] sm:$0xff] %v1112
      %1145 = vst [vmem:[%s324 + $0x18] sm:$0xff] %v1113
      %1146 = vst [vmem:[%s324 + $0x20] sm:$0xff] %v1114
      %1147 = vst [vmem:[%s324 + $0x28] sm:$0xff] %v1115
      %1148 = vst [vmem:[%s324 + $0x30] sm:$0xff] %v1116
      %1149 = vst [vmem:[%s324 + $0x38] sm:$0xff] %v1117
      %1150 = vst [vmem:[%s324 + $0x40] sm:$0xff] %v1118
      %1151 = vst [vmem:[%s324 + $0x48] sm:$0xff] %v1119
      %1152 = vst [vmem:[%s324 + $0x50] sm:$0xff] %v1120
      %1153 = vst [vmem:[%s324 + $0x58] sm:$0xff] %v1121
      %1154 = vst [vmem:[%s324 + $0x60] sm:$0xff] %v1122
      %1155 = vst [vmem:[%s324 + $0x68] sm:$0xff] %v1123
      %1156 = vst [vmem:[%s324 + $0x70] sm:$0xff] %v1124
      %1157 = vst [vmem:[%s324 + $0x78] sm:$0xff] %v1125
      %1158 = vst [vmem:[%s324 + $0x80] sm:$0xff] %v1126
      %1159 = vst [vmem:[%s324 + $0x88] sm:$0xff] %v1127
      %1160 = vst [vmem:[%s324 + $0x90] sm:$0xff] %v1128
      %1161 = vst [vmem:[%s324 + $0x98] sm:$0xff] %v1129
      %1162 = vst [vmem:[%s324 + $0xa0] sm:$0xff] %v1130
      %1163 = vst [vmem:[%s324 + $0xa8] sm:$0xff] %v1131
      %1164 = vst [vmem:[%s324 + $0xb0] sm:$0xff] %v1132
      %1165 = vst [vmem:[%s324 + $0xb8] sm:$0xff] %v1133
      %1166 = vst [vmem:[%s324 + $0xc0] sm:$0xff] %v1134
      %1167 = vst [vmem:[%s324 + $0xc8] sm:$0xff] %v1135
      %1168 = vst [vmem:[%s324 + $0xd0] sm:$0xff] %v1136
      %1169 = vst [vmem:[%s324 + $0xd8] sm:$0xff] %v1137
      %1170 = vst [vmem:[%s324 + $0xe0] sm:$0xff] %v1138
      %1171 = vst [vmem:[%s324 + $0xe8] sm:$0xff] %v1139
      %1172 = vst [vmem:[%s324 + $0xf0] sm:$0xff] %v1140
      %1173 = vst [vmem:[%s324 + $0xf8] sm:$0xff] %v1141
      %s1174 = smul.u32 32, %s18
      %p1175 = scmp.lt.s32.totalorder %s1174, 63
      %s1176 = scalar_select %p1175, %s1174, 63
      %s1177 = smul.addr %s1176, 8
      %s1178 = scalar_lea.vmem %s7, %s1177
      // Predicated region
      $region49: #{vae_forward_pallas.3} parent=47 // pred_check
        %p1179 = pneg %p198
      $region50: #{vae_forward_pallas.3} parent=47 // pred_check_branch
        %1181 = sbr.rel (%p1179) target = $region52
      $region51: #{vae_forward_pallas.3} parent=47 // pred_region
        %s1182 = smul.u32 32, %s18
      $region52: #{vae_forward_pallas.3} parent=47 // pred_fallthru
        _
    $region48: #{vae_forward_pallas.3} parent=5 // pred_fallthru
      _
    %p1183 = scmp.le.s32.totalorder 2, %s13
    // Predicated region
    $region53: #{vae_forward_pallas.3} parent=5 // pred_check
      %p1184 = pneg %p1183
    $region54: #{vae_forward_pallas.3} parent=5 // pred_check_branch
      %1186 = sbr.rel (%p1184) target = $region56
    $region55: #{vae_forward_pallas.3} parent=5 // pred_region
      %s1187 = ssub.s32 %s13, 2
      // Predicated region
      $region57: #{vae_forward_pallas.3} parent=55 // pred_check
        %p1188 = pneg %p204
      $region58: #{vae_forward_pallas.3} parent=55 // pred_check_branch
        %1190 = sbr.rel (%p1188) target = $region60
      $region59: #{vae_forward_pallas.3} parent=55 // pred_region
        %s1191 = smul.u32 32, %s19
        %p1192 = scmp.lt.s32.totalorder %s1191, 63
        %s1193 = scalar_select %p1192, %s1191, 63
        %s1194 = smul.addr %s1193, 8
        %s1195 = scalar_lea.vmem %s7, %s1194
      $region60: #{vae_forward_pallas.3} parent=55 // pred_fallthru
        _
    $region56: #{vae_forward_pallas.3} parent=5 // pred_fallthru
      _
  $region6: #{vae_forward_pallas.3} parent=0 // loop_footer
    %s17 = sadd.s32 1, %s13
  $region7: #{vae_forward_pallas.3} parent=0 // loop_footer_branch
    %12 = sbr.rel target = $region3
  $region8: #{vae_forward_pallas.3} parent=0 // loop_exit
    _

</llo_original>
